<compile_context>
chip_gen: v7x
topology: tpu7x:2x2x1
jax: 0.10.0
libtpu: 0.0.40
codegen_flags: <defaults>
</compile_context>

<pallas_src>
import functools
import math

import jax
import jax.numpy as jnp
from jax.experimental import pallas as pl
from jax.experimental.pallas import tpu as pltpu


CFG = dict(
    vocab=64,
    max_pos=16,
    type_vocab=2,
    hidden=32,
    heads=2,
    layers=2,
    intermediate=64,
    middle_hidden=16,   # config.middle_hidden_size
)

LANE = 128      # pad narrow output widths to a full lane group (dense vst)
LN_EPS = 1e-12


# ---------------------------------------------------------------------------
# Fused kernel: grid = (batch_tiles, num_layers); one step == one encoder
# layer for one batch tile.  The residual stream lives in VMEM scratch.
# ---------------------------------------------------------------------------
def _fused_text_kernel(
    emb_ref, mask_ref,
    emb_g_ref, emb_b_ref,
    qkv_w_ref, qkv_b_ref,
    wo_ref, bo_ref,
    ln1_g_ref, ln1_b_ref,
    w1_ref, b1_ref,
    w2_ref, b2_ref,
    ln2_g_ref, ln2_b_ref,
    pool_w_ref, pool_b_ref,
    trans_w_ref, trans_b_ref,
    hid_out_ref, pool_out_ref,
    x_scratch,
    *, batch_tile, seq, heads,
):
    hidden = x_scratch.shape[-1]
    dh = hidden // heads
    scale = 1.0 / math.sqrt(dh)
    tb = batch_tile
    rows = tb * seq

    def layernorm(v, g, b):
        mean = jnp.mean(v, axis=-1, keepdims=True)
        var = jnp.mean(jnp.square(v - mean), axis=-1, keepdims=True)
        return (v - mean) * jax.lax.rsqrt(var + LN_EPS) * g + b

    def mxu(a_f32, w_ref, b_ref=None):
        # bf16 operands on the MXU, f32 accumulation.
        out = jnp.dot(a_f32.astype(jnp.bfloat16), w_ref[...],
                      preferred_element_type=jnp.float32)
        if b_ref is not None:
            out = out + b_ref[...]
        return out

    # ---- layer 0 of this batch tile: LayerNorm(embeddings) seeds residual ----
    @pl.when(pl.program_id(1) == 0)
    def _():
        x_scratch[...] = layernorm(emb_ref[...].astype(jnp.float32),
                                   emb_g_ref[...], emb_b_ref[...])

    x = x_scratch[...]                   # [rows, H] f32 residual stream (VMEM)
    mask_add = mask_ref[...]             # [tb, 1, S] additive attention mask

    # ---- fused QKV projection: one [H, 3H] bf16 MXU pass ----
    qkv = mxu(x, qkv_w_ref, qkv_b_ref)                    # [rows, 3H] f32
    qkv3 = qkv.reshape(tb, seq, 3 * hidden)               # leading-dim split only

    # ---- multi-head attention: one batched contraction per head ----
    head_ctx = []
    for h in range(heads):
        c0 = h * dh
        q_h = qkv3[:, :, 0 * hidden + c0:0 * hidden + c0 + dh].astype(jnp.bfloat16)
        k_h = qkv3[:, :, 1 * hidden + c0:1 * hidden + c0 + dh].astype(jnp.bfloat16)
        v_h = qkv3[:, :, 2 * hidden + c0:2 * hidden + c0 + dh].astype(jnp.bfloat16)
        s = jnp.einsum('bqd,bkd->bqk', q_h, k_h,
                       preferred_element_type=jnp.float32) * scale
        s = s + mask_add
        s = s - jnp.max(s, axis=-1, keepdims=True)
        p = jnp.exp(s)
        p = p * pl.reciprocal(jnp.sum(p, axis=-1, keepdims=True), approx=True)
        ctx_h = jnp.einsum('bqk,bkd->bqd', p.astype(jnp.bfloat16), v_h,
                           preferred_element_type=jnp.float32)
        head_ctx.append(ctx_h.reshape(rows, dh))
    ctx = jnp.concatenate(head_ctx, axis=-1)              # [rows, H] f32

    attn_out = mxu(ctx, wo_ref, bo_ref)
    x = layernorm(attn_out + x, ln1_g_ref[...], ln1_b_ref[...])

    ff = mxu(x, w1_ref, b1_ref)
    ff = jax.nn.gelu(ff, approximate=True)                # tanh-GELU -> EUP slot
    ff = mxu(ff, w2_ref, b2_ref)
    x = layernorm(ff + x, ln2_g_ref[...], ln2_b_ref[...])

    x_scratch[...] = x

    # ---- last layer step: trans head on all rows, pooler on CLS rows only ----
    @pl.when(pl.program_id(1) == pl.num_programs(1) - 1)
    def _():
        # TODO(synk): Dropout is the identity here (inference mode); no RNG dropout.
        hid_out_ref[...] = jnp.maximum(mxu(x, trans_w_ref, trans_b_ref), 0.0)

        # Gather only the [CLS] rows of this batch tile before the pooler
        # (previously the pooler ran on all rows and S-1 of S were discarded).
        cls = jnp.concatenate([x[b * seq:b * seq + 1, :] for b in range(tb)],
                              axis=0)                                 # [tb, H]
        pooled = jnp.tanh(mxu(cls, pool_w_ref, pool_b_ref))           # [tb, H]
        trans_pool = jnp.maximum(mxu(pooled, trans_w_ref, trans_b_ref), 0.0)
        pool_out_ref[...] = trans_pool[:, None, :]                    # [tb,1,LANE]


# ---------------------------------------------------------------------------
# Synthetic, deterministic parameter init (mini-BERT + trans head)
# ---------------------------------------------------------------------------
def init_params(key, cfg):
    H, I, M = cfg["hidden"], cfg["intermediate"], cfg["middle_hidden"]
    scale = 0.02

    def nrm(k, shape):
        return scale * jax.random.normal(k, shape, dtype=jnp.float32)

    keys = iter(jax.random.split(key, 64))
    p = {
        "word_emb": nrm(next(keys), (cfg["vocab"], H)),
        "pos_emb": nrm(next(keys), (cfg["max_pos"], H)),
        "type_emb": nrm(next(keys), (cfg["type_vocab"], H)),
        "emb_ln_g": jnp.ones((H,), jnp.float32),
        "emb_ln_b": jnp.zeros((H,), jnp.float32),
        "pool_w": nrm(next(keys), (H, H)),
        "pool_b": jnp.zeros((H,), jnp.float32),
        "trans_w": nrm(next(keys), (H, M)),
        "trans_b": jnp.zeros((M,), jnp.float32),
        "layers": [],
    }
    for _ in range(cfg["layers"]):
        p["layers"].append({
            "wq": nrm(next(keys), (H, H)), "bq": jnp.zeros((H,), jnp.float32),
            "wk": nrm(next(keys), (H, H)), "bk": jnp.zeros((H,), jnp.float32),
            "wv": nrm(next(keys), (H, H)), "bv": jnp.zeros((H,), jnp.float32),
            "wo": nrm(next(keys), (H, H)), "bo": jnp.zeros((H,), jnp.float32),
            "ln1_g": jnp.ones((H,), jnp.float32), "ln1_b": jnp.zeros((H,), jnp.float32),
            "w1": nrm(next(keys), (H, I)), "b1": jnp.zeros((I,), jnp.float32),
            "w2": nrm(next(keys), (I, H)), "b2": jnp.zeros((H,), jnp.float32),
            "ln2_g": jnp.ones((H,), jnp.float32), "ln2_b": jnp.zeros((H,), jnp.float32),
        })
    return p


def pack_params(params, cfg):
    """Stack per-layer weights (layer grid axis), fuse QKV, pad trans head,
    and cast all matmul weights to bf16 (biases / LN params stay f32)."""
    H, M = cfg["hidden"], cfg["middle_hidden"]
    layers = params["layers"]
    bf16 = jnp.bfloat16

    def stack_w(name):
        return jnp.stack([l[name] for l in layers]).astype(bf16)     # [L, A, B]

    def stack_b(name):
        return jnp.stack([l[name][None, :] for l in layers])         # [L, 1, N]

    qkv_w = jnp.stack(
        [jnp.concatenate([l["wq"], l["wk"], l["wv"]], axis=1)
         for l in layers]).astype(bf16)
    qkv_b = jnp.stack(
        [jnp.concatenate([l["bq"], l["bk"], l["bv"]])[None, :] for l in layers])

    trans_w = jnp.zeros((H, LANE), jnp.float32).at[:, :M].set(
        params["trans_w"]).astype(bf16)
    trans_b = jnp.zeros((1, LANE), jnp.float32).at[0, :M].set(params["trans_b"])

    return dict(
        word_emb=params["word_emb"], pos_emb=params["pos_emb"],
        type_emb=params["type_emb"],
        emb_ln_g=params["emb_ln_g"].reshape(1, H),
        emb_ln_b=params["emb_ln_b"].reshape(1, H),
        qkv_w=qkv_w, qkv_b=qkv_b,
        wo=stack_w("wo"), bo=stack_b("bo"),
        ln1_g=stack_b("ln1_g"), ln1_b=stack_b("ln1_b"),
        w1=stack_w("w1"), b1=stack_b("b1"),
        w2=stack_w("w2"), b2=stack_b("b2"),
        ln2_g=stack_b("ln2_g"), ln2_b=stack_b("ln2_b"),
        pool_w=params["pool_w"].astype(bf16), pool_b=params["pool_b"].reshape(1, H),
        trans_w=trans_w, trans_b=trans_b,
    )


# ---------------------------------------------------------------------------
# TextModel.forward
# ---------------------------------------------------------------------------
def text_model_forward(packed, bert_inputs, masks, token_type_ids, cfg=CFG,
                       batch_tile=1):
    B, S = bert_inputs.shape
    H, heads, L = cfg["hidden"], cfg["heads"], cfg["layers"]
    I, M = cfg["intermediate"], cfg["middle_hidden"]
    assert B % batch_tile == 0
    TB = batch_tile
    BS = B * S

    # Embedding table gathers stay as XLA glue (data-dependent gather).
    we = packed["word_emb"][bert_inputs]                      # [B, S, H]
    pe = packed["pos_emb"][jnp.arange(S)][None, :, :]         # [1, S, H]
    te = packed["type_emb"][token_type_ids]                   # [B, S, H]
    emb = (we + pe + te).reshape(BS, H).astype(jnp.float32)

    mask_add = ((1.0 - masks.astype(jnp.float32)) * -1e9).reshape(B, 1, S)

    def const(shape):
        n = len(shape)
        return pl.BlockSpec(shape, lambda b, l: (0,) * n)

    def per_batch(shape):
        n = len(shape)
        return pl.BlockSpec(shape, lambda b, l: (b,) + (0,) * (n - 1))

    def per_layer(shape):
        n = len(shape)
        return pl.BlockSpec((pl.Squeezed(),) + shape,
                            lambda b, l: (l,) + (0,) * n)

    kern = functools.partial(_fused_text_kernel, batch_tile=TB, seq=S, heads=heads)

    # TODO(synk): at real BERT sizes (H=768, S=512) also tile the row/K axes,
    # single-buffer the constant-index pooler/trans weights (pl.Buffered(1)),
    # and re-budget vmem_limit_bytes so double-buffered bf16 per-layer weight
    # blocks fit v7x's 64 MiB VMEM; at this demo size full-array blocks fit.
    out_hid, out_pool = pl.pallas_call(
        kern,
        out_shape=(jax.ShapeDtypeStruct((BS, LANE), jnp.float32),
                   jax.ShapeDtypeStruct((B, 1, LANE), jnp.float32)),
        grid=(B // TB, L),
        in_specs=[
            per_batch((TB * S, H)),                  # embeddings
            per_batch((TB, 1, S)),                   # additive attention mask
            const((1, H)), const((1, H)),            # embedding LayerNorm
            per_layer((H, 3 * H)), per_layer((1, 3 * H)),   # fused QKV (bf16 W)
            per_layer((H, H)), per_layer((1, H)),            # attn output proj
            per_layer((1, H)), per_layer((1, H)),            # LN1
            per_layer((H, I)), per_layer((1, I)),            # FFN up
            per_layer((I, H)), per_layer((1, H)),            # FFN down
            per_layer((1, H)), per_layer((1, H)),            # LN2
            const((H, H)), const((1, H)),            # pooler (bf16 W)
            const((H, LANE)), const((1, LANE)),      # trans head (lane-padded)
        ],
        out_specs=(per_batch((TB * S, LANE)),
                   per_batch((TB, 1, LANE))),
        scratch_shapes=[pltpu.VMEM((TB * S, H), jnp.float32)],
        compiler_params=pltpu.CompilerParams(
            # batch tiles independent -> megacore-parallel on v7x;
            # layer axis carries the residual stream in scratch -> arbitrary.
            dimension_semantics=("parallel", "arbitrary"),
            vmem_limit_bytes=64 * 1024 * 1024,
        ),
    )(emb, mask_add,
      packed["emb_ln_g"], packed["emb_ln_b"],
      packed["qkv_w"], packed["qkv_b"],
      packed["wo"], packed["bo"],
      packed["ln1_g"], packed["ln1_b"],
      packed["w1"], packed["b1"],
      packed["w2"], packed["b2"],
      packed["ln2_g"], packed["ln2_b"],
      packed["pool_w"], packed["pool_b"],
      packed["trans_w"], packed["trans_b"])

    trans_hidden = out_hid[:, :M].reshape(B, S, M)
    trans_pool = out_pool.reshape(B, LANE)[:, :M]
    return trans_hidden, trans_pool


# ---------------------------------------------------------------------------
if __name__ == "__main__":
    key = jax.random.PRNGKey(0)
    k_params, k_ids = jax.random.split(key)

    B, S = 2, 8
    params = init_params(k_params, CFG)
    packed = pack_params(params, CFG)

    bert_inputs = jax.random.randint(k_ids, (B, S), 0, CFG["vocab"], dtype=jnp.int32)
    masks = jnp.ones((B, S), dtype=jnp.int32)
    token_type_ids = jnp.zeros((B, S), dtype=jnp.int32)

    trans_hidden, trans_pool = text_model_forward(packed, bert_inputs, masks,
                                                  token_type_ids, batch_tile=1)
    jax.block_until_ready((trans_hidden, trans_pool))

    assert trans_hidden.shape == (B, S, CFG["middle_hidden"])
    assert trans_pool.shape == (B, CFG["middle_hidden"])
    print("KERNEL_OK")
</pallas_src>

<mosaic_0001>
module attributes {stable_mosaic.version = 11 : i64} {
  func.func @_fused_text_kernel(%arg0: i32, %arg1: i32, %arg2: memref<8x32xf32, #tpu.memory_space<vmem>>, %arg3: memref<1x1x8xf32, #tpu.memory_space<vmem>>, %arg4: memref<1x32xf32, #tpu.memory_space<vmem>>, %arg5: memref<1x32xf32, #tpu.memory_space<vmem>>, %arg6: memref<1x32x96xbf16, #tpu.memory_space<vmem>>, %arg7: memref<1x1x96xf32, #tpu.memory_space<vmem>>, %arg8: memref<1x32x32xbf16, #tpu.memory_space<vmem>>, %arg9: memref<1x1x32xf32, #tpu.memory_space<vmem>>, %arg10: memref<1x1x32xf32, #tpu.memory_space<vmem>>, %arg11: memref<1x1x32xf32, #tpu.memory_space<vmem>>, %arg12: memref<1x32x64xbf16, #tpu.memory_space<vmem>>, %arg13: memref<1x1x64xf32, #tpu.memory_space<vmem>>, %arg14: memref<1x64x32xbf16, #tpu.memory_space<vmem>>, %arg15: memref<1x1x32xf32, #tpu.memory_space<vmem>>, %arg16: memref<1x1x32xf32, #tpu.memory_space<vmem>>, %arg17: memref<1x1x32xf32, #tpu.memory_space<vmem>>, %arg18: memref<32x32xbf16, #tpu.memory_space<vmem>>, %arg19: memref<1x32xf32, #tpu.memory_space<vmem>>, %arg20: memref<32x128xbf16, #tpu.memory_space<vmem>>, %arg21: memref<1x128xf32, #tpu.memory_space<vmem>>, %arg22: memref<8x128xf32, #tpu.memory_space<vmem>>, %arg23: memref<1x1x128xf32, #tpu.memory_space<vmem>>, %arg24: memref<8x32xf32, #tpu.memory_space<vmem>>) attributes {dimension_semantics = [#tpu.dimension_semantics<parallel>, #tpu.dimension_semantics<arbitrary>], iteration_bounds = array<i64: 2, 2>, scalar_prefetch = 0 : i64, scratch_operands = 1 : i64, tpu.core_type = #tpu.core_type<tc>, window_params = [{transform_indices = @transform_0, window_bounds = array<i64: 8, 32>}, {transform_indices = @transform_1, window_bounds = array<i64: 1, 1, 8>}, {pipeline_mode = #tpu.pipeline_mode<synchronous>, transform_indices = @transform_2, window_bounds = array<i64: 1, 32>}, {pipeline_mode = #tpu.pipeline_mode<synchronous>, transform_indices = @transform_3, window_bounds = array<i64: 1, 32>}, {transform_indices = @transform_4, window_bounds = array<i64: 1, 32, 96>}, {transform_indices = @transform_5, window_bounds = array<i64: 1, 1, 96>}, {transform_indices = @transform_6, window_bounds = array<i64: 1, 32, 32>}, {transform_indices = @transform_7, window_bounds = array<i64: 1, 1, 32>}, {transform_indices = @transform_8, window_bounds = array<i64: 1, 1, 32>}, {transform_indices = @transform_9, window_bounds = array<i64: 1, 1, 32>}, {transform_indices = @transform_10, window_bounds = array<i64: 1, 32, 64>}, {transform_indices = @transform_11, window_bounds = array<i64: 1, 1, 64>}, {transform_indices = @transform_12, window_bounds = array<i64: 1, 64, 32>}, {transform_indices = @transform_13, window_bounds = array<i64: 1, 1, 32>}, {transform_indices = @transform_14, window_bounds = array<i64: 1, 1, 32>}, {transform_indices = @transform_15, window_bounds = array<i64: 1, 1, 32>}, {pipeline_mode = #tpu.pipeline_mode<synchronous>, transform_indices = @transform_16, window_bounds = array<i64: 32, 32>}, {pipeline_mode = #tpu.pipeline_mode<synchronous>, transform_indices = @transform_17, window_bounds = array<i64: 1, 32>}, {pipeline_mode = #tpu.pipeline_mode<synchronous>, transform_indices = @transform_18, window_bounds = array<i64: 32, 128>}, {pipeline_mode = #tpu.pipeline_mode<synchronous>, transform_indices = @transform_19, window_bounds = array<i64: 1, 128>}, {transform_indices = @transform_20, window_bounds = array<i64: 8, 128>}, {transform_indices = @transform_21, window_bounds = array<i64: 1, 1, 128>}]} {
    %c0_i32 = arith.constant 0 : i32
    %0 = arith.cmpi eq, %arg1, %c0_i32 : i32
    %1 = arith.extui %0 : i1 to i32
    %c0_i32_0 = arith.constant 0 : i32
    %2 = arith.cmpi ne, %1, %c0_i32_0 : i32
    scf.if %2 {
      %c0_71 = arith.constant 0 : index
      %c0_72 = arith.constant 0 : index
      %158 = vector.load %arg2[%c0_71, %c0_72] : memref<8x32xf32, #tpu.memory_space<vmem>>, vector<8x32xf32>
      %c0_73 = arith.constant 0 : index
      %c0_74 = arith.constant 0 : index
      %159 = vector.load %arg4[%c0_73, %c0_74] : memref<1x32xf32, #tpu.memory_space<vmem>>, vector<1x32xf32>
      %c0_75 = arith.constant 0 : index
      %c0_76 = arith.constant 0 : index
      %160 = vector.load %arg5[%c0_75, %c0_76] : memref<1x32xf32, #tpu.memory_space<vmem>>, vector<1x32xf32>
      %cst_77 = arith.constant dense<0.000000e+00> : vector<8xf32>
      %161 = vector.multi_reduction <add>, %158, %cst_77 [1] : vector<8x32xf32> to vector<8xf32>
      %162 = vector.shape_cast %161 : vector<8xf32> to vector<8x1xf32>
      %cst_78 = arith.constant 3.200000e+01 : f32
      %163 = vector.broadcast %cst_78 : f32 to vector<8x1xf32>
      %164 = arith.divf %162, %163 : vector<8x1xf32>
      %165 = vector.broadcast %164 : vector<8x1xf32> to vector<8x32xf32>
      %166 = arith.subf %158, %165 : vector<8x32xf32>
      %167 = arith.mulf %166, %166 : vector<8x32xf32>
      %cst_79 = arith.constant dense<0.000000e+00> : vector<8xf32>
      %168 = vector.multi_reduction <add>, %167, %cst_79 [1] : vector<8x32xf32> to vector<8xf32>
      %169 = vector.shape_cast %168 : vector<8xf32> to vector<8x1xf32>
      %cst_80 = arith.constant 3.200000e+01 : f32
      %170 = vector.broadcast %cst_80 : f32 to vector<8x1xf32>
      %171 = arith.divf %169, %170 : vector<8x1xf32>
      %172 = vector.broadcast %164 : vector<8x1xf32> to vector<8x32xf32>
      %173 = arith.subf %158, %172 : vector<8x32xf32>
      %cst_81 = arith.constant 9.99999996E-13 : f32
      %174 = vector.broadcast %cst_81 : f32 to vector<8x1xf32>
      %175 = arith.addf %171, %174 : vector<8x1xf32>
      %176 = math.rsqrt %175 : vector<8x1xf32>
      %177 = vector.broadcast %176 : vector<8x1xf32> to vector<8x32xf32>
      %178 = arith.mulf %173, %177 : vector<8x32xf32>
      %179 = vector.broadcast %159 : vector<1x32xf32> to vector<8x32xf32>
      %180 = arith.mulf %178, %179 : vector<8x32xf32>
      %181 = vector.broadcast %160 : vector<1x32xf32> to vector<8x32xf32>
      %182 = arith.addf %180, %181 : vector<8x32xf32>
      %c0_82 = arith.constant 0 : index
      %c0_83 = arith.constant 0 : index
      %183 = vector.load %arg24[%c0_82, %c0_83] : memref<8x32xf32, #tpu.memory_space<vmem>>, vector<8x32xf32>
      tpu.vector_store %arg24[%c0_82, %c0_83], %182 {strides = array<i32>} : memref<8x32xf32, #tpu.memory_space<vmem>>, vector<8x32xf32>,
    } else {
    }
    %c0 = arith.constant 0 : index
    %c0_1 = arith.constant 0 : index
    %3 = vector.load %arg24[%c0, %c0_1] : memref<8x32xf32, #tpu.memory_space<vmem>>, vector<8x32xf32>
    %c0_2 = arith.constant 0 : index
    %c0_3 = arith.constant 0 : index
    %c0_4 = arith.constant 0 : index
    %4 = vector.load %arg3[%c0_2, %c0_3, %c0_4] : memref<1x1x8xf32, #tpu.memory_space<vmem>>, vector<1x1x8xf32>
    %5 = arith.truncf %3 : vector<8x32xf32> to vector<8x32xbf16>
    %c0_5 = arith.constant 0 : index
    %c0_6 = arith.constant 0 : index
    %c0_7 = arith.constant 0 : index
    %6 = vector.load %arg6[%c0_5, %c0_6, %c0_7] : memref<1x32x96xbf16, #tpu.memory_space<vmem>>, vector<1x32x96xbf16>
    %7 = vector.shape_cast %6 : vector<1x32x96xbf16> to vector<32x96xbf16>
    %cst = arith.constant dense<0.000000e+00> : vector<8x96xf32>
    %8 = tpu.matmul %5, %7, %cst {dimension_numbers = #tpu.dot_dimension_numbers<[1], [0], [0], [1], [0, 0, 1, 1], [], []>} : vector<8x32xbf16>, vector<32x96xbf16>, vector<8x96xf32> -> vector<8x96xf32>
    %c0_8 = arith.constant 0 : index
    %c0_9 = arith.constant 0 : index
    %c0_10 = arith.constant 0 : index
    %9 = vector.load %arg7[%c0_8, %c0_9, %c0_10] : memref<1x1x96xf32, #tpu.memory_space<vmem>>, vector<1x1x96xf32>
    %10 = vector.shape_cast %9 : vector<1x1x96xf32> to vector<1x96xf32>
    %11 = vector.broadcast %10 : vector<1x96xf32> to vector<8x96xf32>
    %12 = arith.addf %8, %11 : vector<8x96xf32>
    %13 = vector.shape_cast %12 : vector<8x96xf32> to vector<1x8x96xf32>
    %14 = vector.extract_strided_slice %13 {offsets = [0, 0, 0], sizes = [1, 8, 16], strides = [1, 1, 1]} : vector<1x8x96xf32> to vector<1x8x16xf32>
    %15 = arith.truncf %14 : vector<1x8x16xf32> to vector<1x8x16xbf16>
    %16 = vector.extract_strided_slice %13 {offsets = [0, 0, 32], sizes = [1, 8, 16], strides = [1, 1, 1]} : vector<1x8x96xf32> to vector<1x8x16xf32>
    %17 = arith.truncf %16 : vector<1x8x16xf32> to vector<1x8x16xbf16>
    %18 = vector.extract_strided_slice %13 {offsets = [0, 0, 64], sizes = [1, 8, 16], strides = [1, 1, 1]} : vector<1x8x96xf32> to vector<1x8x16xf32>
    %19 = arith.truncf %18 : vector<1x8x16xf32> to vector<1x8x16xbf16>
    "tpu.trace_start"() <{level = 10 : i32, message = "bqd,bkd->bqk"}> : () -> ()
    %cst_11 = arith.constant dense<0.000000e+00> : vector<1x8x8xf32>
    %20 = tpu.matmul %15, %17, %cst_11 {dimension_numbers = #tpu.dot_dimension_numbers<[2], [2], [1], [1], [0, 0, 0, 1, 1, 1], [0], [0]>} : vector<1x8x16xbf16>, vector<1x8x16xbf16>, vector<1x8x8xf32> -> vector<1x8x8xf32>
    "tpu.trace_stop"() : () -> ()
    %cst_12 = arith.constant 2.500000e-01 : f32
    %21 = vector.broadcast %cst_12 : f32 to vector<1x8x8xf32>
    %22 = arith.mulf %20, %21 : vector<1x8x8xf32>
    %23 = vector.broadcast %4 : vector<1x1x8xf32> to vector<1x8x8xf32>
    %24 = arith.addf %22, %23 : vector<1x8x8xf32>
    %cst_13 = arith.constant dense<0xFF800000> : vector<1x8xf32>
    %25 = vector.multi_reduction <maximumf>, %24, %cst_13 [2] : vector<1x8x8xf32> to vector<1x8xf32>
    %26 = vector.shape_cast %25 : vector<1x8xf32> to vector<1x8x1xf32>
    %27 = vector.broadcast %26 : vector<1x8x1xf32> to vector<1x8x8xf32>
    %28 = arith.subf %24, %27 : vector<1x8x8xf32>
    %29 = math.exp %28 : vector<1x8x8xf32>
    %cst_14 = arith.constant dense<0.000000e+00> : vector<1x8xf32>
    %30 = vector.multi_reduction <add>, %29, %cst_14 [2] : vector<1x8x8xf32> to vector<1x8xf32>
    %31 = vector.shape_cast %30 : vector<1x8xf32> to vector<1x8x1xf32>
    %32 = tpu.reciprocal %31 {approx = true} : vector<1x8x1xf32> -> vector<1x8x1xf32>
    %33 = vector.broadcast %32 : vector<1x8x1xf32> to vector<1x8x8xf32>
    %34 = arith.mulf %29, %33 : vector<1x8x8xf32>
    %35 = arith.truncf %34 : vector<1x8x8xf32> to vector<1x8x8xbf16>
    "tpu.trace_start"() <{level = 10 : i32, message = "bqk,bkd->bqd"}> : () -> ()
    %cst_15 = arith.constant dense<0.000000e+00> : vector<1x8x16xf32>
    %36 = tpu.matmul %35, %19, %cst_15 {dimension_numbers = #tpu.dot_dimension_numbers<[2], [1], [1], [2], [0, 0, 0, 1, 1, 2], [0], [0]>} : vector<1x8x8xbf16>, vector<1x8x16xbf16>, vector<1x8x16xf32> -> vector<1x8x16xf32>
    "tpu.trace_stop"() : () -> ()
    %37 = vector.shape_cast %36 : vector<1x8x16xf32> to vector<8x16xf32>
    %38 = vector.extract_strided_slice %13 {offsets = [0, 0, 16], sizes = [1, 8, 16], strides = [1, 1, 1]} : vector<1x8x96xf32> to vector<1x8x16xf32>
    %39 = arith.truncf %38 : vector<1x8x16xf32> to vector<1x8x16xbf16>
    %40 = vector.extract_strided_slice %13 {offsets = [0, 0, 48], sizes = [1, 8, 16], strides = [1, 1, 1]} : vector<1x8x96xf32> to vector<1x8x16xf32>
    %41 = arith.truncf %40 : vector<1x8x16xf32> to vector<1x8x16xbf16>
    %42 = vector.extract_strided_slice %13 {offsets = [0, 0, 80], sizes = [1, 8, 16], strides = [1, 1, 1]} : vector<1x8x96xf32> to vector<1x8x16xf32>
    %43 = arith.truncf %42 : vector<1x8x16xf32> to vector<1x8x16xbf16>
    "tpu.trace_start"() <{level = 10 : i32, message = "bqd,bkd->bqk"}> : () -> ()
    %cst_16 = arith.constant dense<0.000000e+00> : vector<1x8x8xf32>
    %44 = tpu.matmul %39, %41, %cst_16 {dimension_numbers = #tpu.dot_dimension_numbers<[2], [2], [1], [1], [0, 0, 0, 1, 1, 1], [0], [0]>} : vector<1x8x16xbf16>, vector<1x8x16xbf16>, vector<1x8x8xf32> -> vector<1x8x8xf32>
    "tpu.trace_stop"() : () -> ()
    %cst_17 = arith.constant 2.500000e-01 : f32
    %45 = vector.broadcast %cst_17 : f32 to vector<1x8x8xf32>
    %46 = arith.mulf %44, %45 : vector<1x8x8xf32>
    %47 = vector.broadcast %4 : vector<1x1x8xf32> to vector<1x8x8xf32>
    %48 = arith.addf %46, %47 : vector<1x8x8xf32>
    %cst_18 = arith.constant dense<0xFF800000> : vector<1x8xf32>
    %49 = vector.multi_reduction <maximumf>, %48, %cst_18 [2] : vector<1x8x8xf32> to vector<1x8xf32>
    %50 = vector.shape_cast %49 : vector<1x8xf32> to vector<1x8x1xf32>
    %51 = vector.broadcast %50 : vector<1x8x1xf32> to vector<1x8x8xf32>
    %52 = arith.subf %48, %51 : vector<1x8x8xf32>
    %53 = math.exp %52 : vector<1x8x8xf32>
    %cst_19 = arith.constant dense<0.000000e+00> : vector<1x8xf32>
    %54 = vector.multi_reduction <add>, %53, %cst_19 [2] : vector<1x8x8xf32> to vector<1x8xf32>
    %55 = vector.shape_cast %54 : vector<1x8xf32> to vector<1x8x1xf32>
    %56 = tpu.reciprocal %55 {approx = true} : vector<1x8x1xf32> -> vector<1x8x1xf32>
    %57 = vector.broadcast %56 : vector<1x8x1xf32> to vector<1x8x8xf32>
    %58 = arith.mulf %53, %57 : vector<1x8x8xf32>
    %59 = arith.truncf %58 : vector<1x8x8xf32> to vector<1x8x8xbf16>
    "tpu.trace_start"() <{level = 10 : i32, message = "bqk,bkd->bqd"}> : () -> ()
    %cst_20 = arith.constant dense<0.000000e+00> : vector<1x8x16xf32>
    %60 = tpu.matmul %59, %43, %cst_20 {dimension_numbers = #tpu.dot_dimension_numbers<[2], [1], [1], [2], [0, 0, 0, 1, 1, 2], [0], [0]>} : vector<1x8x8xbf16>, vector<1x8x16xbf16>, vector<1x8x16xf32> -> vector<1x8x16xf32>
    "tpu.trace_stop"() : () -> ()
    %61 = vector.shape_cast %60 : vector<1x8x16xf32> to vector<8x16xf32>
    %62 = tpu.concatenate %37, %61 in 1 : vector<8x16xf32>, vector<8x16xf32> -> vector<8x32xf32>
    %63 = arith.truncf %62 : vector<8x32xf32> to vector<8x32xbf16>
    %c0_21 = arith.constant 0 : index
    %c0_22 = arith.constant 0 : index
    %c0_23 = arith.constant 0 : index
    %64 = vector.load %arg8[%c0_21, %c0_22, %c0_23] : memref<1x32x32xbf16, #tpu.memory_space<vmem>>, vector<1x32x32xbf16>
    %65 = vector.shape_cast %64 : vector<1x32x32xbf16> to vector<32x32xbf16>
    %cst_24 = arith.constant dense<0.000000e+00> : vector<8x32xf32>
    %66 = tpu.matmul %63, %65, %cst_24 {dimension_numbers = #tpu.dot_dimension_numbers<[1], [0], [0], [1], [0, 0, 1, 1], [], []>} : vector<8x32xbf16>, vector<32x32xbf16>, vector<8x32xf32> -> vector<8x32xf32>
    %c0_25 = arith.constant 0 : index
    %c0_26 = arith.constant 0 : index
    %c0_27 = arith.constant 0 : index
    %67 = vector.load %arg9[%c0_25, %c0_26, %c0_27] : memref<1x1x32xf32, #tpu.memory_space<vmem>>, vector<1x1x32xf32>
    %68 = vector.shape_cast %67 : vector<1x1x32xf32> to vector<1x32xf32>
    %69 = vector.broadcast %68 : vector<1x32xf32> to vector<8x32xf32>
    %70 = arith.addf %66, %69 : vector<8x32xf32>
    %71 = arith.addf %70, %3 : vector<8x32xf32>
    %c0_28 = arith.constant 0 : index
    %c0_29 = arith.constant 0 : index
    %c0_30 = arith.constant 0 : index
    %72 = vector.load %arg10[%c0_28, %c0_29, %c0_30] : memref<1x1x32xf32, #tpu.memory_space<vmem>>, vector<1x1x32xf32>
    %73 = vector.shape_cast %72 : vector<1x1x32xf32> to vector<1x32xf32>
    %c0_31 = arith.constant 0 : index
    %c0_32 = arith.constant 0 : index
    %c0_33 = arith.constant 0 : index
    %74 = vector.load %arg11[%c0_31, %c0_32, %c0_33] : memref<1x1x32xf32, #tpu.memory_space<vmem>>, vector<1x1x32xf32>
    %75 = vector.shape_cast %74 : vector<1x1x32xf32> to vector<1x32xf32>
    %cst_34 = arith.constant dense<0.000000e+00> : vector<8xf32>
    %76 = vector.multi_reduction <add>, %71, %cst_34 [1] : vector<8x32xf32> to vector<8xf32>
    %77 = vector.shape_cast %76 : vector<8xf32> to vector<8x1xf32>
    %cst_35 = arith.constant 3.200000e+01 : f32
    %78 = vector.broadcast %cst_35 : f32 to vector<8x1xf32>
    %79 = arith.divf %77, %78 : vector<8x1xf32>
    %80 = vector.broadcast %79 : vector<8x1xf32> to vector<8x32xf32>
    %81 = arith.subf %71, %80 : vector<8x32xf32>
    %82 = arith.mulf %81, %81 : vector<8x32xf32>
    %cst_36 = arith.constant dense<0.000000e+00> : vector<8xf32>
    %83 = vector.multi_reduction <add>, %82, %cst_36 [1] : vector<8x32xf32> to vector<8xf32>
    %84 = vector.shape_cast %83 : vector<8xf32> to vector<8x1xf32>
    %cst_37 = arith.constant 3.200000e+01 : f32
    %85 = vector.broadcast %cst_37 : f32 to vector<8x1xf32>
    %86 = arith.divf %84, %85 : vector<8x1xf32>
    %87 = vector.broadcast %79 : vector<8x1xf32> to vector<8x32xf32>
    %88 = arith.subf %71, %87 : vector<8x32xf32>
    %cst_38 = arith.constant 9.99999996E-13 : f32
    %89 = vector.broadcast %cst_38 : f32 to vector<8x1xf32>
    %90 = arith.addf %86, %89 : vector<8x1xf32>
    %91 = math.rsqrt %90 : vector<8x1xf32>
    %92 = vector.broadcast %91 : vector<8x1xf32> to vector<8x32xf32>
    %93 = arith.mulf %88, %92 : vector<8x32xf32>
    %94 = vector.broadcast %73 : vector<1x32xf32> to vector<8x32xf32>
    %95 = arith.mulf %93, %94 : vector<8x32xf32>
    %96 = vector.broadcast %75 : vector<1x32xf32> to vector<8x32xf32>
    %97 = arith.addf %95, %96 : vector<8x32xf32>
    %98 = arith.truncf %97 : vector<8x32xf32> to vector<8x32xbf16>
    %c0_39 = arith.constant 0 : index
    %c0_40 = arith.constant 0 : index
    %c0_41 = arith.constant 0 : index
    %99 = vector.load %arg12[%c0_39, %c0_40, %c0_41] : memref<1x32x64xbf16, #tpu.memory_space<vmem>>, vector<1x32x64xbf16>
    %100 = vector.shape_cast %99 : vector<1x32x64xbf16> to vector<32x64xbf16>
    %cst_42 = arith.constant dense<0.000000e+00> : vector<8x64xf32>
    %101 = tpu.matmul %98, %100, %cst_42 {dimension_numbers = #tpu.dot_dimension_numbers<[1], [0], [0], [1], [0, 0, 1, 1], [], []>} : vector<8x32xbf16>, vector<32x64xbf16>, vector<8x64xf32> -> vector<8x64xf32>
    %c0_43 = arith.constant 0 : index
    %c0_44 = arith.constant 0 : index
    %c0_45 = arith.constant 0 : index
    %102 = vector.load %arg13[%c0_43, %c0_44, %c0_45] : memref<1x1x64xf32, #tpu.memory_space<vmem>>, vector<1x1x64xf32>
    %103 = vector.shape_cast %102 : vector<1x1x64xf32> to vector<1x64xf32>
    %104 = vector.broadcast %103 : vector<1x64xf32> to vector<8x64xf32>
    %105 = arith.addf %101, %104 : vector<8x64xf32>
    %106 = arith.mulf %105, %105 : vector<8x64xf32>
    %107 = arith.mulf %105, %106 : vector<8x64xf32>
    %cst_46 = arith.constant 4.471500e-02 : f32
    %108 = vector.broadcast %cst_46 : f32 to vector<8x64xf32>
    %109 = arith.mulf %108, %107 : vector<8x64xf32>
    %110 = arith.addf %105, %109 : vector<8x64xf32>
    %cst_47 = arith.constant 0.797884583 : f32
    %111 = vector.broadcast %cst_47 : f32 to vector<8x64xf32>
    %112 = arith.mulf %111, %110 : vector<8x64xf32>
    %113 = math.tanh %112 : vector<8x64xf32>
    %cst_48 = arith.constant 1.000000e+00 : f32
    %114 = vector.broadcast %cst_48 : f32 to vector<8x64xf32>
    %115 = arith.addf %114, %113 : vector<8x64xf32>
    %cst_49 = arith.constant 5.000000e-01 : f32
    %116 = vector.broadcast %cst_49 : f32 to vector<8x64xf32>
    %117 = arith.mulf %116, %115 : vector<8x64xf32>
    %118 = arith.mulf %105, %117 : vector<8x64xf32>
    %119 = arith.truncf %118 : vector<8x64xf32> to vector<8x64xbf16>
    %c0_50 = arith.constant 0 : index
    %c0_51 = arith.constant 0 : index
    %c0_52 = arith.constant 0 : index
    %120 = vector.load %arg14[%c0_50, %c0_51, %c0_52] : memref<1x64x32xbf16, #tpu.memory_space<vmem>>, vector<1x64x32xbf16>
    %121 = vector.shape_cast %120 : vector<1x64x32xbf16> to vector<64x32xbf16>
    %cst_53 = arith.constant dense<0.000000e+00> : vector<8x32xf32>
    %122 = tpu.matmul %119, %121, %cst_53 {dimension_numbers = #tpu.dot_dimension_numbers<[1], [0], [0], [1], [0, 0, 1, 1], [], []>} : vector<8x64xbf16>, vector<64x32xbf16>, vector<8x32xf32> -> vector<8x32xf32>
    %c0_54 = arith.constant 0 : index
    %c0_55 = arith.constant 0 : index
    %c0_56 = arith.constant 0 : index
    %123 = vector.load %arg15[%c0_54, %c0_55, %c0_56] : memref<1x1x32xf32, #tpu.memory_space<vmem>>, vector<1x1x32xf32>
    %124 = vector.shape_cast %123 : vector<1x1x32xf32> to vector<1x32xf32>
    %125 = vector.broadcast %124 : vector<1x32xf32> to vector<8x32xf32>
    %126 = arith.addf %122, %125 : vector<8x32xf32>
    %127 = arith.addf %126, %97 : vector<8x32xf32>
    %c0_57 = arith.constant 0 : index
    %c0_58 = arith.constant 0 : index
    %c0_59 = arith.constant 0 : index
    %128 = vector.load %arg16[%c0_57, %c0_58, %c0_59] : memref<1x1x32xf32, #tpu.memory_space<vmem>>, vector<1x1x32xf32>
    %129 = vector.shape_cast %128 : vector<1x1x32xf32> to vector<1x32xf32>
    %c0_60 = arith.constant 0 : index
    %c0_61 = arith.constant 0 : index
    %c0_62 = arith.constant 0 : index
    %130 = vector.load %arg17[%c0_60, %c0_61, %c0_62] : memref<1x1x32xf32, #tpu.memory_space<vmem>>, vector<1x1x32xf32>
    %131 = vector.shape_cast %130 : vector<1x1x32xf32> to vector<1x32xf32>
    %cst_63 = arith.constant dense<0.000000e+00> : vector<8xf32>
    %132 = vector.multi_reduction <add>, %127, %cst_63 [1] : vector<8x32xf32> to vector<8xf32>
    %133 = vector.shape_cast %132 : vector<8xf32> to vector<8x1xf32>
    %cst_64 = arith.constant 3.200000e+01 : f32
    %134 = vector.broadcast %cst_64 : f32 to vector<8x1xf32>
    %135 = arith.divf %133, %134 : vector<8x1xf32>
    %136 = vector.broadcast %135 : vector<8x1xf32> to vector<8x32xf32>
    %137 = arith.subf %127, %136 : vector<8x32xf32>
    %138 = arith.mulf %137, %137 : vector<8x32xf32>
    %cst_65 = arith.constant dense<0.000000e+00> : vector<8xf32>
    %139 = vector.multi_reduction <add>, %138, %cst_65 [1] : vector<8x32xf32> to vector<8xf32>
    %140 = vector.shape_cast %139 : vector<8xf32> to vector<8x1xf32>
    %cst_66 = arith.constant 3.200000e+01 : f32
    %141 = vector.broadcast %cst_66 : f32 to vector<8x1xf32>
    %142 = arith.divf %140, %141 : vector<8x1xf32>
    %143 = vector.broadcast %135 : vector<8x1xf32> to vector<8x32xf32>
    %144 = arith.subf %127, %143 : vector<8x32xf32>
    %cst_67 = arith.constant 9.99999996E-13 : f32
    %145 = vector.broadcast %cst_67 : f32 to vector<8x1xf32>
    %146 = arith.addf %142, %145 : vector<8x1xf32>
    %147 = math.rsqrt %146 : vector<8x1xf32>
    %148 = vector.broadcast %147 : vector<8x1xf32> to vector<8x32xf32>
    %149 = arith.mulf %144, %148 : vector<8x32xf32>
    %150 = vector.broadcast %129 : vector<1x32xf32> to vector<8x32xf32>
    %151 = arith.mulf %149, %150 : vector<8x32xf32>
    %152 = vector.broadcast %131 : vector<1x32xf32> to vector<8x32xf32>
    %153 = arith.addf %151, %152 : vector<8x32xf32>
    %c0_68 = arith.constant 0 : index
    %c0_69 = arith.constant 0 : index
    %154 = vector.load %arg24[%c0_68, %c0_69] : memref<8x32xf32, #tpu.memory_space<vmem>>, vector<8x32xf32>
    tpu.vector_store %arg24[%c0_68, %c0_69], %153 {strides = array<i32>} : memref<8x32xf32, #tpu.memory_space<vmem>>, vector<8x32xf32>,
    %c1_i32 = arith.constant 1 : i32
    %155 = arith.cmpi eq, %arg1, %c1_i32 : i32
    %156 = arith.extui %155 : i1 to i32
    %c0_i32_70 = arith.constant 0 : i32
    %157 = arith.cmpi ne, %156, %c0_i32_70 : i32
    scf.if %157 {
      %158 = arith.truncf %153 : vector<8x32xf32> to vector<8x32xbf16>
      %c0_71 = arith.constant 0 : index
      %c0_72 = arith.constant 0 : index
      %159 = vector.load %arg20[%c0_71, %c0_72] : memref<32x128xbf16, #tpu.memory_space<vmem>>, vector<32x128xbf16>
      %cst_73 = arith.constant dense<0.000000e+00> : vector<8x128xf32>
      %160 = tpu.matmul %158, %159, %cst_73 {dimension_numbers = #tpu.dot_dimension_numbers<[1], [0], [0], [1], [0, 0, 1, 1], [], []>} : vector<8x32xbf16>, vector<32x128xbf16>, vector<8x128xf32> -> vector<8x128xf32>
      %c0_74 = arith.constant 0 : index
      %c0_75 = arith.constant 0 : index
      %161 = vector.load %arg21[%c0_74, %c0_75] : memref<1x128xf32, #tpu.memory_space<vmem>>, vector<1x128xf32>
      %162 = vector.broadcast %161 : vector<1x128xf32> to vector<8x128xf32>
      %163 = arith.addf %160, %162 : vector<8x128xf32>
      %cst_76 = arith.constant 0.000000e+00 : f32
      %164 = vector.broadcast %cst_76 : f32 to vector<8x128xf32>
      %165 = arith.maximumf %163, %164 : vector<8x128xf32>
      %c0_77 = arith.constant 0 : index
      %c0_78 = arith.constant 0 : index
      %166 = vector.load %arg22[%c0_77, %c0_78] : memref<8x128xf32, #tpu.memory_space<vmem>>, vector<8x128xf32>
      tpu.vector_store %arg22[%c0_77, %c0_78], %165 {strides = array<i32>} : memref<8x128xf32, #tpu.memory_space<vmem>>, vector<8x128xf32>,
      %167 = vector.extract_strided_slice %153 {offsets = [0, 0], sizes = [1, 32], strides = [1, 1]} : vector<8x32xf32> to vector<1x32xf32>
      %168 = arith.truncf %167 : vector<1x32xf32> to vector<1x32xbf16>
      %c0_79 = arith.constant 0 : index
      %c0_80 = arith.constant 0 : index
      %169 = vector.load %arg18[%c0_79, %c0_80] : memref<32x32xbf16, #tpu.memory_space<vmem>>, vector<32x32xbf16>
      %cst_81 = arith.constant dense<0.000000e+00> : vector<1x32xf32>
      %170 = tpu.matmul %168, %169, %cst_81 {dimension_numbers = #tpu.dot_dimension_numbers<[1], [0], [0], [1], [0, 0, 1, 1], [], []>} : vector<1x32xbf16>, vector<32x32xbf16>, vector<1x32xf32> -> vector<1x32xf32>
      %c0_82 = arith.constant 0 : index
      %c0_83 = arith.constant 0 : index
      %171 = vector.load %arg19[%c0_82, %c0_83] : memref<1x32xf32, #tpu.memory_space<vmem>>, vector<1x32xf32>
      %172 = arith.addf %170, %171 : vector<1x32xf32>
      %173 = math.tanh %172 : vector<1x32xf32>
      %174 = arith.truncf %173 : vector<1x32xf32> to vector<1x32xbf16>
      %c0_84 = arith.constant 0 : index
      %c0_85 = arith.constant 0 : index
      %175 = vector.load %arg20[%c0_84, %c0_85] : memref<32x128xbf16, #tpu.memory_space<vmem>>, vector<32x128xbf16>
      %cst_86 = arith.constant dense<0.000000e+00> : vector<1x128xf32>
      %176 = tpu.matmul %174, %175, %cst_86 {dimension_numbers = #tpu.dot_dimension_numbers<[1], [0], [0], [1], [0, 0, 1, 1], [], []>} : vector<1x32xbf16>, vector<32x128xbf16>, vector<1x128xf32> -> vector<1x128xf32>
      %c0_87 = arith.constant 0 : index
      %c0_88 = arith.constant 0 : index
      %177 = vector.load %arg21[%c0_87, %c0_88] : memref<1x128xf32, #tpu.memory_space<vmem>>, vector<1x128xf32>
      %178 = arith.addf %176, %177 : vector<1x128xf32>
      %cst_89 = arith.constant 0.000000e+00 : f32
      %179 = vector.broadcast %cst_89 : f32 to vector<1x128xf32>
      %180 = arith.maximumf %178, %179 : vector<1x128xf32>
      %181 = vector.shape_cast %180 : vector<1x128xf32> to vector<1x1x128xf32>
      %c0_90 = arith.constant 0 : index
      %c0_91 = arith.constant 0 : index
      %c0_92 = arith.constant 0 : index
      %182 = vector.load %arg23[%c0_90, %c0_91, %c0_92] : memref<1x1x128xf32, #tpu.memory_space<vmem>>, vector<1x1x128xf32>
      tpu.vector_store %arg23[%c0_90, %c0_91, %c0_92], %181 {strides = array<i32>} : memref<1x1x128xf32, #tpu.memory_space<vmem>>, vector<1x1x128xf32>,
    } else {
    }
    return
  }
  func.func @transform_0(%arg0: i32, %arg1: i32) -> (i32, i32) {
    %c0_i32 = arith.constant 0 : i32
    %c0_i32_0 = arith.constant 0 : i32
    return %arg0, %c0_i32 : i32, i32
  }
  func.func @transform_1(%arg0: i32, %arg1: i32) -> (i32, i32, i32) {
    %c0_i32 = arith.constant 0 : i32
    %c0_i32_0 = arith.constant 0 : i32
    %c0_i32_1 = arith.constant 0 : i32
    return %arg0, %c0_i32, %c0_i32_0 : i32, i32, i32
  }
  func.func @transform_2(%arg0: i32, %arg1: i32) -> (i32, i32) {
    %c0_i32 = arith.constant 0 : i32
    %c0_i32_0 = arith.constant 0 : i32
    %c0_i32_1 = arith.constant 0 : i32
    return %c0_i32, %c0_i32_0 : i32, i32
  }
  func.func @transform_3(%arg0: i32, %arg1: i32) -> (i32, i32) {
    %c0_i32 = arith.constant 0 : i32
    %c0_i32_0 = arith.constant 0 : i32
    %c0_i32_1 = arith.constant 0 : i32
    return %c0_i32, %c0_i32_0 : i32, i32
  }
  func.func @transform_4(%arg0: i32, %arg1: i32) -> (i32, i32, i32) {
    %c0_i32 = arith.constant 0 : i32
    %c0_i32_0 = arith.constant 0 : i32
    %c0_i32_1 = arith.constant 0 : i32
    return %arg1, %c0_i32, %c0_i32_0 : i32, i32, i32
  }
  func.func @transform_5(%arg0: i32, %arg1: i32) -> (i32, i32, i32) {
    %c0_i32 = arith.constant 0 : i32
    %c0_i32_0 = arith.constant 0 : i32
    %c0_i32_1 = arith.constant 0 : i32
    return %arg1, %c0_i32, %c0_i32_0 : i32, i32, i32
  }
  func.func @transform_6(%arg0: i32, %arg1: i32) -> (i32, i32, i32) {
    %c0_i32 = arith.constant 0 : i32
    %c0_i32_0 = arith.constant 0 : i32
    %c0_i32_1 = arith.constant 0 : i32
    return %arg1, %c0_i32, %c0_i32_0 : i32, i32, i32
  }
  func.func @transform_7(%arg0: i32, %arg1: i32) -> (i32, i32, i32) {
    %c0_i32 = arith.constant 0 : i32
    %c0_i32_0 = arith.constant 0 : i32
    %c0_i32_1 = arith.constant 0 : i32
    return %arg1, %c0_i32, %c0_i32_0 : i32, i32, i32
  }
  func.func @transform_8(%arg0: i32, %arg1: i32) -> (i32, i32, i32) {
    %c0_i32 = arith.constant 0 : i32
    %c0_i32_0 = arith.constant 0 : i32
    %c0_i32_1 = arith.constant 0 : i32
    return %arg1, %c0_i32, %c0_i32_0 : i32, i32, i32
  }
  func.func @transform_9(%arg0: i32, %arg1: i32) -> (i32, i32, i32) {
    %c0_i32 = arith.constant 0 : i32
    %c0_i32_0 = arith.constant 0 : i32
    %c0_i32_1 = arith.constant 0 : i32
    return %arg1, %c0_i32, %c0_i32_0 : i32, i32, i32
  }
  func.func @transform_10(%arg0: i32, %arg1: i32) -> (i32, i32, i32) {
    %c0_i32 = arith.constant 0 : i32
    %c0_i32_0 = arith.constant 0 : i32
    %c0_i32_1 = arith.constant 0 : i32
    return %arg1, %c0_i32, %c0_i32_0 : i32, i32, i32
  }
  func.func @transform_11(%arg0: i32, %arg1: i32) -> (i32, i32, i32) {
    %c0_i32 = arith.constant 0 : i32
    %c0_i32_0 = arith.constant 0 : i32
    %c0_i32_1 = arith.constant 0 : i32
    return %arg1, %c0_i32, %c0_i32_0 : i32, i32, i32
  }
  func.func @transform_12(%arg0: i32, %arg1: i32) -> (i32, i32, i32) {
    %c0_i32 = arith.constant 0 : i32
    %c0_i32_0 = arith.constant 0 : i32
    %c0_i32_1 = arith.constant 0 : i32
    return %arg1, %c0_i32, %c0_i32_0 : i32, i32, i32
  }
  func.func @transform_13(%arg0: i32, %arg1: i32) -> (i32, i32, i32) {
    %c0_i32 = arith.constant 0 : i32
    %c0_i32_0 = arith.constant 0 : i32
    %c0_i32_1 = arith.constant 0 : i32
    return %arg1, %c0_i32, %c0_i32_0 : i32, i32, i32
  }
  func.func @transform_14(%arg0: i32, %arg1: i32) -> (i32, i32, i32) {
    %c0_i32 = arith.constant 0 : i32
    %c0_i32_0 = arith.constant 0 : i32
    %c0_i32_1 = arith.constant 0 : i32
    return %arg1, %c0_i32, %c0_i32_0 : i32, i32, i32
  }
  func.func @transform_15(%arg0: i32, %arg1: i32) -> (i32, i32, i32) {
    %c0_i32 = arith.constant 0 : i32
    %c0_i32_0 = arith.constant 0 : i32
    %c0_i32_1 = arith.constant 0 : i32
    return %arg1, %c0_i32, %c0_i32_0 : i32, i32, i32
  }
  func.func @transform_16(%arg0: i32, %arg1: i32) -> (i32, i32) {
    %c0_i32 = arith.constant 0 : i32
    %c0_i32_0 = arith.constant 0 : i32
    %c0_i32_1 = arith.constant 0 : i32
    return %c0_i32, %c0_i32_0 : i32, i32
  }
  func.func @transform_17(%arg0: i32, %arg1: i32) -> (i32, i32) {
    %c0_i32 = arith.constant 0 : i32
    %c0_i32_0 = arith.constant 0 : i32
    %c0_i32_1 = arith.constant 0 : i32
    return %c0_i32, %c0_i32_0 : i32, i32
  }
  func.func @transform_18(%arg0: i32, %arg1: i32) -> (i32, i32) {
    %c0_i32 = arith.constant 0 : i32
    %c0_i32_0 = arith.constant 0 : i32
    %c0_i32_1 = arith.constant 0 : i32
    return %c0_i32, %c0_i32_0 : i32, i32
  }
  func.func @transform_19(%arg0: i32, %arg1: i32) -> (i32, i32) {
    %c0_i32 = arith.constant 0 : i32
    %c0_i32_0 = arith.constant 0 : i32
    %c0_i32_1 = arith.constant 0 : i32
    return %c0_i32, %c0_i32_0 : i32, i32
  }
  func.func @transform_20(%arg0: i32, %arg1: i32) -> (i32, i32) {
    %c0_i32 = arith.constant 0 : i32
    %c0_i32_0 = arith.constant 0 : i32
    return %arg0, %c0_i32 : i32, i32
  }
  func.func @transform_21(%arg0: i32, %arg1: i32) -> (i32, i32, i32) {
    %c0_i32 = arith.constant 0 : i32
    %c0_i32_0 = arith.constant 0 : i32
    %c0_i32_1 = arith.constant 0 : i32
    return %arg0, %c0_i32, %c0_i32_0 : i32, i32, i32
  }
}

</mosaic_0001>

<llo_original>
// kernel: tpu_custom_call.1
$region0: #{tpu_custom_call.1}
  #allocation0 [shape = 'u32[]', space=smem, size = 0x4, offset = 0x4, fixed_abs, tag = 'smem constant byte address 0x4 - core index']
  #allocation1 [shape = 'u32[144,128]{1,0:T(1,128)}', space=vmem, size = 0x12000, scoped, tag = 'internal scratch']
  #allocation2 [shape = 'f32[8,32]{1,0:T(8,128)}', space=vmem, size = 0x1000, scoped, tag = 'scratch operand']
  %s0 = inlined_call_operand.hbm [shape: f32[16,32], index: 0, kind: input, shape index: {}]
  %s1 = inlined_call_operand.hbm [shape: f32[2,1,8], index: 1, kind: input, shape index: {}]
  %s2 = inlined_call_operand.hbm [shape: f32[1,32], index: 2, kind: input, shape index: {}]
  %s3 = inlined_call_operand.hbm [shape: f32[1,32], index: 3, kind: input, shape index: {}]
  %s4 = inlined_call_operand.hbm [shape: bf16[2,32,96], index: 4, kind: input, shape index: {}]
  %s5 = inlined_call_operand.hbm [shape: f32[2,1,96], index: 5, kind: input, shape index: {}]
  %s6 = inlined_call_operand.hbm [shape: bf16[2,32,32], index: 6, kind: input, shape index: {}]
  %s7 = inlined_call_operand.hbm [shape: f32[2,1,32], index: 7, kind: input, shape index: {}]
  %s8 = inlined_call_operand.hbm [shape: f32[2,1,32], index: 8, kind: input, shape index: {}]
  %s9 = inlined_call_operand.hbm [shape: f32[2,1,32], index: 9, kind: input, shape index: {}]
  %s10 = inlined_call_operand.hbm [shape: bf16[2,32,64], index: 10, kind: input, shape index: {}]
  %s11 = inlined_call_operand.hbm [shape: f32[2,1,64], index: 11, kind: input, shape index: {}]
  %s12 = inlined_call_operand.hbm [shape: bf16[2,64,32], index: 12, kind: input, shape index: {}]
  %s13 = inlined_call_operand.hbm [shape: f32[2,1,32], index: 13, kind: input, shape index: {}]
  %s14 = inlined_call_operand.hbm [shape: f32[2,1,32], index: 14, kind: input, shape index: {}]
  %s15 = inlined_call_operand.hbm [shape: f32[2,1,32], index: 15, kind: input, shape index: {}]
  %s16 = inlined_call_operand.hbm [shape: bf16[32,32], index: 16, kind: input, shape index: {}]
  %s17 = inlined_call_operand.hbm [shape: f32[1,32], index: 17, kind: input, shape index: {}]
  %s18 = inlined_call_operand.hbm [shape: bf16[32,128], index: 18, kind: input, shape index: {}]
  %s19 = inlined_call_operand.hbm [shape: f32[1,128], index: 19, kind: input, shape index: {}]
  %s20 = inlined_call_operand.hbm [shape: f32[16,128], index: 20, kind: output, shape index: {0}]
  %s21 = inlined_call_operand.hbm [shape: f32[2,1,128], index: 21, kind: output, shape index: {1}]
  %22 = xla_tuple %s20, %s21
  %s23 = sld [smem:[#allocation0]]
  $region209: #{tpu_custom_call.1} parent=0
    _
  %s25 = ssub.s32 1, %s23
  %s26 = scalar_select 0, %s25, %s23
  $region1: #{tpu_custom_call.1} parent=0
    #allocation3 [shape = 'u8[8192]{0}', space=vmem, size = 0x2000, scoped, tag = 'input window, operand 0']
    #allocation4 [shape = 's32[2]{0}', space=sflag, size = 0x8, scoped, tag = 'scoped memory for tpu_custom_call.1']
    #allocation5 [shape = 's32[2]{0}', space=sflag, size = 0x8, scoped, tag = 'scoped memory for tpu_custom_call.1']
    #allocation6 [shape = 'u8[1024]{0}', space=vmem, size = 0x400, scoped, tag = 'input window, operand 1']
    #allocation7 [shape = 's32[2]{0}', space=sflag, size = 0x8, scoped, tag = 'scoped memory for tpu_custom_call.1']
    #allocation8 [shape = 'u8[512]{0}', space=vmem, size = 0x400, scoped, tag = 'input window, operand 2, single buffered']
    #allocation9 [shape = 'u8[512]{0}', space=vmem, size = 0x400, scoped, tag = 'input window, operand 3, single buffered']
    #allocation10 [shape = 's32[1]{0}', space=sflag, size = 0x4, scoped, tag = 'scoped memory for tpu_custom_call.1']
    #allocation11 [shape = 'u8[16384]{0}', space=vmem, size = 0x4000, scoped, tag = 'input window, operand 4']
    #allocation12 [shape = 'u8[1024]{0}', space=vmem, size = 0x400, scoped, tag = 'input window, operand 5']
    #allocation13 [shape = 'u8[16384]{0}', space=vmem, size = 0x4000, scoped, tag = 'input window, operand 6']
    #allocation14 [shape = 'u8[1024]{0}', space=vmem, size = 0x400, scoped, tag = 'input window, operand 7']
    #allocation15 [shape = 'u8[1024]{0}', space=vmem, size = 0x400, scoped, tag = 'input window, operand 8']
    #allocation16 [shape = 'u8[1024]{0}', space=vmem, size = 0x400, scoped, tag = 'input window, operand 9']
    #allocation17 [shape = 'u8[16384]{0}', space=vmem, size = 0x4000, scoped, tag = 'input window, operand 10']
    #allocation18 [shape = 'u8[1024]{0}', space=vmem, size = 0x400, scoped, tag = 'input window, operand 11']
    #allocation19 [shape = 'u8[32768]{0}', space=vmem, size = 0x8000, scoped, tag = 'input window, operand 12']
    #allocation20 [shape = 'u8[1024]{0}', space=vmem, size = 0x400, scoped, tag = 'input window, operand 13']
    #allocation21 [shape = 'u8[1024]{0}', space=vmem, size = 0x400, scoped, tag = 'input window, operand 14']
    #allocation22 [shape = 'u8[1024]{0}', space=vmem, size = 0x400, scoped, tag = 'input window, operand 15']
    #allocation23 [shape = 'u8[8192]{0}', space=vmem, size = 0x2000, scoped, tag = 'input window, operand 16, single buffered']
    #allocation24 [shape = 'u8[512]{0}', space=vmem, size = 0x400, scoped, tag = 'input window, operand 17, single buffered']
    #allocation25 [shape = 's32[1]{0}', space=sflag, size = 0x4, scoped, tag = 'scoped memory for tpu_custom_call.1']
    #allocation26 [shape = 'u8[8192]{0}', space=vmem, size = 0x2000, scoped, tag = 'input window, operand 18, single buffered']
    #allocation27 [shape = 'u8[512]{0}', space=vmem, size = 0x400, scoped, tag = 'input window, operand 19, single buffered']
    #allocation28 [shape = 's32[1]{0}', space=sflag, size = 0x4, scoped, tag = 'scoped memory for tpu_custom_call.1']
    #allocation29 [shape = 'u8[8192]{0}', space=vmem, size = 0x2000, scoped, tag = 'output window, operand 0']
    #allocation30 [shape = 'u8[1024]{0}', space=vmem, size = 0x400, scoped, tag = 'output window, operand 1']
    #allocation31 [shape = 's32[2]{0}', space=sflag, size = 0x8, scoped, tag = 'scoped memory for tpu_custom_call.1']
    %27 = vsyncpa [#allocation4], 0
    %s28 = scalar_lea.sflag [#allocation4], 1
    %29 = vsyncpa %s28, 0
    %30 = vsyncpa [#allocation7], 0
    %s31 = scalar_lea.sflag [#allocation7], 1
    %32 = vsyncpa %s31, 0
    %33 = vsyncpa [#allocation10], 0
    %34 = vsyncpa [#allocation25], 0
    %35 = vsyncpa [#allocation28], 0
    %36 = vsyncpa [#allocation5], 0
    %s37 = scalar_lea.sflag [#allocation5], 1
    %38 = vsyncpa %s37, 0
    %39 = vsyncpa [#allocation31], 0
    %s40 = scalar_lea.sflag [#allocation31], 1
    %41 = vsyncpa %s40, 0
    loop: start=0, step=1, limit=6
    $region2: #{tpu_custom_call.1} parent=1 // loop_pre_header
      _
    $region3: #{tpu_custom_call.1} parent=1 // loop_header
      %s43 = sphi 0, %s47
      %p44 = scmp.ge.s32.totalorder %s43, 6
      %s50 = sphi 0, %s62
      %s51 = sphi 0, %s58
      %s52 = sphi 0, %s50
      %s53 = sphi 0, %s51
      %s54 = sphi 0, %s52
      %s55 = sphi 0, %s53
      %s65 = sphi 0, %s67
      %s68 = sphi 0, %s65
      %s69 = sphi 0, %s68
      %s85 = sphi 0, %s69
      %s91 = sphi 0, %s93
      %s94 = sphi 0, %s91
      %s95 = sphi 0, %s94
      %s111 = sphi 0, %s95
      %s115 = sphi 0, %s115
      %s117 = sphi 0, %s115
      %s118 = sphi 0, %s117
      %s132 = sphi 0, %s118
      %s136 = sphi 0, %s136
      %s138 = sphi 0, %s136
      %s139 = sphi 0, %s138
      %s153 = sphi 0, %s139
      %s159 = sphi 0, %s161
      %s162 = sphi 0, %s159
      %s163 = sphi 0, %s162
      %s179 = sphi 0, %s163
      %s185 = sphi 0, %s187
      %s188 = sphi 0, %s185
      %s189 = sphi 0, %s188
      %s205 = sphi 0, %s189
      %s211 = sphi 0, %s213
      %s214 = sphi 0, %s211
      %s215 = sphi 0, %s214
      %s231 = sphi 0, %s215
      %s237 = sphi 0, %s239
      %s240 = sphi 0, %s237
      %s241 = sphi 0, %s240
      %s257 = sphi 0, %s241
      %s263 = sphi 0, %s265
      %s266 = sphi 0, %s263
      %s267 = sphi 0, %s266
      %s283 = sphi 0, %s267
      %s289 = sphi 0, %s291
      %s292 = sphi 0, %s289
      %s293 = sphi 0, %s292
      %s309 = sphi 0, %s293
      %s315 = sphi 0, %s317
      %s318 = sphi 0, %s315
      %s319 = sphi 0, %s318
      %s335 = sphi 0, %s319
      %s341 = sphi 0, %s343
      %s344 = sphi 0, %s341
      %s345 = sphi 0, %s344
      %s361 = sphi 0, %s345
      %s367 = sphi 0, %s369
      %s370 = sphi 0, %s367
      %s371 = sphi 0, %s370
      %s387 = sphi 0, %s371
      %s393 = sphi 0, %s395
      %s396 = sphi 0, %s393
      %s397 = sphi 0, %s396
      %s413 = sphi 0, %s397
      %s419 = sphi 0, %s421
      %s422 = sphi 0, %s419
      %s423 = sphi 0, %s422
      %s439 = sphi 0, %s423
      %s445 = sphi 0, %s447
      %s448 = sphi 0, %s445
      %s449 = sphi 0, %s448
      %s465 = sphi 0, %s449
      %s469 = sphi 0, %s469
      %s471 = sphi 0, %s469
      %s472 = sphi 0, %s471
      %s486 = sphi 0, %s472
      %s490 = sphi 0, %s490
      %s492 = sphi 0, %s490
      %s493 = sphi 0, %s492
      %s507 = sphi 0, %s493
      %s511 = sphi 0, %s511
      %s513 = sphi 0, %s511
      %s514 = sphi 0, %s513
      %s528 = sphi 0, %s514
      %s532 = sphi 0, %s532
      %s534 = sphi 0, %s532
      %s535 = sphi 0, %s534
      %s549 = sphi 0, %s535
      %s555 = sphi 0, %s557
      %s558 = sphi 0, %s555
      %s559 = sphi 0, %s558
      %s575 = sphi 0, %s559
      %s581 = sphi 0, %s583
      %s584 = sphi 0, %s581
      %s585 = sphi 0, %s584
      %s601 = sphi 0, %s585
    $region4: #{tpu_custom_call.1} parent=1 // loop_header_branch
      %46 = sbr.rel (%p44) target = $region8
    $region5: #{tpu_custom_call.1} parent=1 // loop_body
      %s48 = ssub.s32 %s43, 1
      %s49 = ssub.s32 %s43, 2
      %s56 = sadd.s32 1, %s51
      %p57 = scmp.ge.s32.totalorder %s56, 2
      %s58 = scalar_select %p57, 0, %s56
      %s59 = sadd.s32 1, %s50
      %s60 = scalar_select %p57, %s59, %s50
      %p61 = scmp.ge.s32.totalorder %s60, 2
      %s62 = scalar_select %p61, 0, %s60
      %s63 = ssub.s32 %s50, %s62
      %p64 = scmp.eq.s32.totalorder %s63, 0
      %s66 = sadd.s32 %s65, 1
      %s67 = scalar_select %p64, %s65, %s66
      %p70 = pneg %p64
      %p71 = scmp.eq.s32.totalorder %s43, 3
      %p72 = por %p70, %p71
      %p73 = scmp.ne.s32.totalorder %s65, %s68
      %p74 = scmp.eq.s32.totalorder %s43, 0
      %p75 = por %p73, %p74
      %p76 = scmp.ne.s32.totalorder %s65, %s68
      %p77 = scmp.eq.s32.totalorder %s48, 3
      %p78 = por %p76, %p77
      %p79 = scmp.ne.s32.totalorder %s68, %s69
      %p80 = scmp.eq.s32.totalorder %s48, 0
      %p81 = por %p79, %p80
      %p82 = scmp.ne.s32.totalorder %s68, %s69
      %p83 = scmp.eq.s32.totalorder %s49, 3
      %p84 = por %p82, %p83
      %p86 = scmp.ne.s32.totalorder %s69, %s85
      %p87 = scmp.eq.s32.totalorder %s49, 0
      %p88 = por %p86, %p87
      %s89 = ssub.s32 %s50, %s62
      %p90 = scmp.eq.s32.totalorder %s89, 0
      %s92 = sadd.s32 %s91, 1
      %s93 = scalar_select %p90, %s91, %s92
      %p96 = pneg %p90
      %p97 = scmp.eq.s32.totalorder %s43, 3
      %p98 = por %p96, %p97
      %p99 = scmp.ne.s32.totalorder %s91, %s94
      %p100 = scmp.eq.s32.totalorder %s43, 0
      %p101 = por %p99, %p100
      %p102 = scmp.ne.s32.totalorder %s91, %s94
      %p103 = scmp.eq.s32.totalorder %s48, 3
      %p104 = por %p102, %p103
      %p105 = scmp.ne.s32.totalorder %s94, %s95
      %p106 = scmp.eq.s32.totalorder %s48, 0
      %p107 = por %p105, %p106
      %p108 = scmp.ne.s32.totalorder %s94, %s95
      %p109 = scmp.eq.s32.totalorder %s49, 3
      %p110 = por %p108, %p109
      %p112 = scmp.ne.s32.totalorder %s95, %s111
      %p113 = scmp.eq.s32.totalorder %s49, 0
      %p114 = por %p112, %p113
      %s116 = sadd.s32 %s115, 1
      %p119 = scmp.eq.s32.totalorder %s43, 3
      %p120 = scmp.ne.s32.totalorder %s115, %s117
      %p121 = scmp.eq.s32.totalorder %s43, 0
      %p122 = por %p120, %p121
      %p123 = scmp.ne.s32.totalorder %s115, %s117
      %p124 = scmp.eq.s32.totalorder %s48, 3
      %p125 = por %p123, %p124
      %p126 = scmp.ne.s32.totalorder %s117, %s118
      %p127 = scmp.eq.s32.totalorder %s48, 0
      %p128 = por %p126, %p127
      %p129 = scmp.ne.s32.totalorder %s117, %s118
      %p130 = scmp.eq.s32.totalorder %s49, 3
      %p131 = por %p129, %p130
      %p133 = scmp.ne.s32.totalorder %s118, %s132
      %p134 = scmp.eq.s32.totalorder %s49, 0
      %p135 = por %p133, %p134
      %s137 = sadd.s32 %s136, 1
      %p140 = scmp.eq.s32.totalorder %s43, 3
      %p141 = scmp.ne.s32.totalorder %s136, %s138
      %p142 = scmp.eq.s32.totalorder %s43, 0
      %p143 = por %p141, %p142
      %p144 = scmp.ne.s32.totalorder %s136, %s138
      %p145 = scmp.eq.s32.totalorder %s48, 3
      %p146 = por %p144, %p145
      %p147 = scmp.ne.s32.totalorder %s138, %s139
      %p148 = scmp.eq.s32.totalorder %s48, 0
      %p149 = por %p147, %p148
      %p150 = scmp.ne.s32.totalorder %s138, %s139
      %p151 = scmp.eq.s32.totalorder %s49, 3
      %p152 = por %p150, %p151
      %p154 = scmp.ne.s32.totalorder %s139, %s153
      %p155 = scmp.eq.s32.totalorder %s49, 0
      %p156 = por %p154, %p155
      %s157 = ssub.s32 %s51, %s58
      %p158 = scmp.eq.s32.totalorder %s157, 0
      %s160 = sadd.s32 %s159, 1
      %s161 = scalar_select %p158, %s159, %s160
      %p164 = pneg %p158
      %p165 = scmp.eq.s32.totalorder %s43, 3
      %p166 = por %p164, %p165
      %p167 = scmp.ne.s32.totalorder %s159, %s162
      %p168 = scmp.eq.s32.totalorder %s43, 0
      %p169 = por %p167, %p168
      %p170 = scmp.ne.s32.totalorder %s159, %s162
      %p171 = scmp.eq.s32.totalorder %s48, 3
      %p172 = por %p170, %p171
      %p173 = scmp.ne.s32.totalorder %s162, %s163
      %p174 = scmp.eq.s32.totalorder %s48, 0
      %p175 = por %p173, %p174
      %p176 = scmp.ne.s32.totalorder %s162, %s163
      %p177 = scmp.eq.s32.totalorder %s49, 3
      %p178 = por %p176, %p177
      %p180 = scmp.ne.s32.totalorder %s163, %s179
      %p181 = scmp.eq.s32.totalorder %s49, 0
      %p182 = por %p180, %p181
      %s183 = ssub.s32 %s51, %s58
      %p184 = scmp.eq.s32.totalorder %s183, 0
      %s186 = sadd.s32 %s185, 1
      %s187 = scalar_select %p184, %s185, %s186
      %p190 = pneg %p184
      %p191 = scmp.eq.s32.totalorder %s43, 3
      %p192 = por %p190, %p191
      %p193 = scmp.ne.s32.totalorder %s185, %s188
      %p194 = scmp.eq.s32.totalorder %s43, 0
      %p195 = por %p193, %p194
      %p196 = scmp.ne.s32.totalorder %s185, %s188
      %p197 = scmp.eq.s32.totalorder %s48, 3
      %p198 = por %p196, %p197
      %p199 = scmp.ne.s32.totalorder %s188, %s189
      %p200 = scmp.eq.s32.totalorder %s48, 0
      %p201 = por %p199, %p200
      %p202 = scmp.ne.s32.totalorder %s188, %s189
      %p203 = scmp.eq.s32.totalorder %s49, 3
      %p204 = por %p202, %p203
      %p206 = scmp.ne.s32.totalorder %s189, %s205
      %p207 = scmp.eq.s32.totalorder %s49, 0
      %p208 = por %p206, %p207
      %s209 = ssub.s32 %s51, %s58
      %p210 = scmp.eq.s32.totalorder %s209, 0
      %s212 = sadd.s32 %s211, 1
      %s213 = scalar_select %p210, %s211, %s212
      %p216 = pneg %p210
      %p217 = scmp.eq.s32.totalorder %s43, 3
      %p218 = por %p216, %p217
      %p219 = scmp.ne.s32.totalorder %s211, %s214
      %p220 = scmp.eq.s32.totalorder %s43, 0
      %p221 = por %p219, %p220
      %p222 = scmp.ne.s32.totalorder %s211, %s214
      %p223 = scmp.eq.s32.totalorder %s48, 3
      %p224 = por %p222, %p223
      %p225 = scmp.ne.s32.totalorder %s214, %s215
      %p226 = scmp.eq.s32.totalorder %s48, 0
      %p227 = por %p225, %p226
      %p228 = scmp.ne.s32.totalorder %s214, %s215
      %p229 = scmp.eq.s32.totalorder %s49, 3
      %p230 = por %p228, %p229
      %p232 = scmp.ne.s32.totalorder %s215, %s231
      %p233 = scmp.eq.s32.totalorder %s49, 0
      %p234 = por %p232, %p233
      %s235 = ssub.s32 %s51, %s58
      %p236 = scmp.eq.s32.totalorder %s235, 0
      %s238 = sadd.s32 %s237, 1
      %s239 = scalar_select %p236, %s237, %s238
      %p242 = pneg %p236
      %p243 = scmp.eq.s32.totalorder %s43, 3
      %p244 = por %p242, %p243
      %p245 = scmp.ne.s32.totalorder %s237, %s240
      %p246 = scmp.eq.s32.totalorder %s43, 0
      %p247 = por %p245, %p246
      %p248 = scmp.ne.s32.totalorder %s237, %s240
      %p249 = scmp.eq.s32.totalorder %s48, 3
      %p250 = por %p248, %p249
      %p251 = scmp.ne.s32.totalorder %s240, %s241
      %p252 = scmp.eq.s32.totalorder %s48, 0
      %p253 = por %p251, %p252
      %p254 = scmp.ne.s32.totalorder %s240, %s241
      %p255 = scmp.eq.s32.totalorder %s49, 3
      %p256 = por %p254, %p255
      %p258 = scmp.ne.s32.totalorder %s241, %s257
      %p259 = scmp.eq.s32.totalorder %s49, 0
      %p260 = por %p258, %p259
      %s261 = ssub.s32 %s51, %s58
      %p262 = scmp.eq.s32.totalorder %s261, 0
      %s264 = sadd.s32 %s263, 1
      %s265 = scalar_select %p262, %s263, %s264
      %p268 = pneg %p262
      %p269 = scmp.eq.s32.totalorder %s43, 3
      %p270 = por %p268, %p269
      %p271 = scmp.ne.s32.totalorder %s263, %s266
      %p272 = scmp.eq.s32.totalorder %s43, 0
      %p273 = por %p271, %p272
      %p274 = scmp.ne.s32.totalorder %s263, %s266
      %p275 = scmp.eq.s32.totalorder %s48, 3
      %p276 = por %p274, %p275
      %p277 = scmp.ne.s32.totalorder %s266, %s267
      %p278 = scmp.eq.s32.totalorder %s48, 0
      %p279 = por %p277, %p278
      %p280 = scmp.ne.s32.totalorder %s266, %s267
      %p281 = scmp.eq.s32.totalorder %s49, 3
      %p282 = por %p280, %p281
      %p284 = scmp.ne.s32.totalorder %s267, %s283
      %p285 = scmp.eq.s32.totalorder %s49, 0
      %p286 = por %p284, %p285
      %s287 = ssub.s32 %s51, %s58
      %p288 = scmp.eq.s32.totalorder %s287, 0
      %s290 = sadd.s32 %s289, 1
      %s291 = scalar_select %p288, %s289, %s290
      %p294 = pneg %p288
      %p295 = scmp.eq.s32.totalorder %s43, 3
      %p296 = por %p294, %p295
      %p297 = scmp.ne.s32.totalorder %s289, %s292
      %p298 = scmp.eq.s32.totalorder %s43, 0
      %p299 = por %p297, %p298
      %p300 = scmp.ne.s32.totalorder %s289, %s292
      %p301 = scmp.eq.s32.totalorder %s48, 3
      %p302 = por %p300, %p301
      %p303 = scmp.ne.s32.totalorder %s292, %s293
      %p304 = scmp.eq.s32.totalorder %s48, 0
      %p305 = por %p303, %p304
      %p306 = scmp.ne.s32.totalorder %s292, %s293
      %p307 = scmp.eq.s32.totalorder %s49, 3
      %p308 = por %p306, %p307
      %p310 = scmp.ne.s32.totalorder %s293, %s309
      %p311 = scmp.eq.s32.totalorder %s49, 0
      %p312 = por %p310, %p311
      %s313 = ssub.s32 %s51, %s58
      %p314 = scmp.eq.s32.totalorder %s313, 0
      %s316 = sadd.s32 %s315, 1
      %s317 = scalar_select %p314, %s315, %s316
      %p320 = pneg %p314
      %p321 = scmp.eq.s32.totalorder %s43, 3
      %p322 = por %p320, %p321
      %p323 = scmp.ne.s32.totalorder %s315, %s318
      %p324 = scmp.eq.s32.totalorder %s43, 0
      %p325 = por %p323, %p324
      %p326 = scmp.ne.s32.totalorder %s315, %s318
      %p327 = scmp.eq.s32.totalorder %s48, 3
      %p328 = por %p326, %p327
      %p329 = scmp.ne.s32.totalorder %s318, %s319
      %p330 = scmp.eq.s32.totalorder %s48, 0
      %p331 = por %p329, %p330
      %p332 = scmp.ne.s32.totalorder %s318, %s319
      %p333 = scmp.eq.s32.totalorder %s49, 3
      %p334 = por %p332, %p333
      %p336 = scmp.ne.s32.totalorder %s319, %s335
      %p337 = scmp.eq.s32.totalorder %s49, 0
      %p338 = por %p336, %p337
      %s339 = ssub.s32 %s51, %s58
      %p340 = scmp.eq.s32.totalorder %s339, 0
      %s342 = sadd.s32 %s341, 1
      %s343 = scalar_select %p340, %s341, %s342
      %p346 = pneg %p340
      %p347 = scmp.eq.s32.totalorder %s43, 3
      %p348 = por %p346, %p347
      %p349 = scmp.ne.s32.totalorder %s341, %s344
      %p350 = scmp.eq.s32.totalorder %s43, 0
      %p351 = por %p349, %p350
      %p352 = scmp.ne.s32.totalorder %s341, %s344
      %p353 = scmp.eq.s32.totalorder %s48, 3
      %p354 = por %p352, %p353
      %p355 = scmp.ne.s32.totalorder %s344, %s345
      %p356 = scmp.eq.s32.totalorder %s48, 0
      %p357 = por %p355, %p356
      %p358 = scmp.ne.s32.totalorder %s344, %s345
      %p359 = scmp.eq.s32.totalorder %s49, 3
      %p360 = por %p358, %p359
      %p362 = scmp.ne.s32.totalorder %s345, %s361
      %p363 = scmp.eq.s32.totalorder %s49, 0
      %p364 = por %p362, %p363
      %s365 = ssub.s32 %s51, %s58
      %p366 = scmp.eq.s32.totalorder %s365, 0
      %s368 = sadd.s32 %s367, 1
      %s369 = scalar_select %p366, %s367, %s368
      %p372 = pneg %p366
      %p373 = scmp.eq.s32.totalorder %s43, 3
      %p374 = por %p372, %p373
      %p375 = scmp.ne.s32.totalorder %s367, %s370
      %p376 = scmp.eq.s32.totalorder %s43, 0
      %p377 = por %p375, %p376
      %p378 = scmp.ne.s32.totalorder %s367, %s370
      %p379 = scmp.eq.s32.totalorder %s48, 3
      %p380 = por %p378, %p379
      %p381 = scmp.ne.s32.totalorder %s370, %s371
      %p382 = scmp.eq.s32.totalorder %s48, 0
      %p383 = por %p381, %p382
      %p384 = scmp.ne.s32.totalorder %s370, %s371
      %p385 = scmp.eq.s32.totalorder %s49, 3
      %p386 = por %p384, %p385
      %p388 = scmp.ne.s32.totalorder %s371, %s387
      %p389 = scmp.eq.s32.totalorder %s49, 0
      %p390 = por %p388, %p389
      %s391 = ssub.s32 %s51, %s58
      %p392 = scmp.eq.s32.totalorder %s391, 0
      %s394 = sadd.s32 %s393, 1
      %s395 = scalar_select %p392, %s393, %s394
      %p398 = pneg %p392
      %p399 = scmp.eq.s32.totalorder %s43, 3
      %p400 = por %p398, %p399
      %p401 = scmp.ne.s32.totalorder %s393, %s396
      %p402 = scmp.eq.s32.totalorder %s43, 0
      %p403 = por %p401, %p402
      %p404 = scmp.ne.s32.totalorder %s393, %s396
      %p405 = scmp.eq.s32.totalorder %s48, 3
      %p406 = por %p404, %p405
      %p407 = scmp.ne.s32.totalorder %s396, %s397
      %p408 = scmp.eq.s32.totalorder %s48, 0
      %p409 = por %p407, %p408
      %p410 = scmp.ne.s32.totalorder %s396, %s397
      %p411 = scmp.eq.s32.totalorder %s49, 3
      %p412 = por %p410, %p411
      %p414 = scmp.ne.s32.totalorder %s397, %s413
      %p415 = scmp.eq.s32.totalorder %s49, 0
      %p416 = por %p414, %p415
      %s417 = ssub.s32 %s51, %s58
      %p418 = scmp.eq.s32.totalorder %s417, 0
      %s420 = sadd.s32 %s419, 1
      %s421 = scalar_select %p418, %s419, %s420
      %p424 = pneg %p418
      %p425 = scmp.eq.s32.totalorder %s43, 3
      %p426 = por %p424, %p425
      %p427 = scmp.ne.s32.totalorder %s419, %s422
      %p428 = scmp.eq.s32.totalorder %s43, 0
      %p429 = por %p427, %p428
      %p430 = scmp.ne.s32.totalorder %s419, %s422
      %p431 = scmp.eq.s32.totalorder %s48, 3
      %p432 = por %p430, %p431
      %p433 = scmp.ne.s32.totalorder %s422, %s423
      %p434 = scmp.eq.s32.totalorder %s48, 0
      %p435 = por %p433, %p434
      %p436 = scmp.ne.s32.totalorder %s422, %s423
      %p437 = scmp.eq.s32.totalorder %s49, 3
      %p438 = por %p436, %p437
      %p440 = scmp.ne.s32.totalorder %s423, %s439
      %p441 = scmp.eq.s32.totalorder %s49, 0
      %p442 = por %p440, %p441
      %s443 = ssub.s32 %s51, %s58
      %p444 = scmp.eq.s32.totalorder %s443, 0
      %s446 = sadd.s32 %s445, 1
      %s447 = scalar_select %p444, %s445, %s446
      %p450 = pneg %p444
      %p451 = scmp.eq.s32.totalorder %s43, 3
      %p452 = por %p450, %p451
      %p453 = scmp.ne.s32.totalorder %s445, %s448
      %p454 = scmp.eq.s32.totalorder %s43, 0
      %p455 = por %p453, %p454
      %p456 = scmp.ne.s32.totalorder %s445, %s448
      %p457 = scmp.eq.s32.totalorder %s48, 3
      %p458 = por %p456, %p457
      %p459 = scmp.ne.s32.totalorder %s448, %s449
      %p460 = scmp.eq.s32.totalorder %s48, 0
      %p461 = por %p459, %p460
      %p462 = scmp.ne.s32.totalorder %s448, %s449
      %p463 = scmp.eq.s32.totalorder %s49, 3
      %p464 = por %p462, %p463
      %p466 = scmp.ne.s32.totalorder %s449, %s465
      %p467 = scmp.eq.s32.totalorder %s49, 0
      %p468 = por %p466, %p467
      %s470 = sadd.s32 %s469, 1
      %p473 = scmp.eq.s32.totalorder %s43, 3
      %p474 = scmp.ne.s32.totalorder %s469, %s471
      %p475 = scmp.eq.s32.totalorder %s43, 0
      %p476 = por %p474, %p475
      %p477 = scmp.ne.s32.totalorder %s469, %s471
      %p478 = scmp.eq.s32.totalorder %s48, 3
      %p479 = por %p477, %p478
      %p480 = scmp.ne.s32.totalorder %s471, %s472
      %p481 = scmp.eq.s32.totalorder %s48, 0
      %p482 = por %p480, %p481
      %p483 = scmp.ne.s32.totalorder %s471, %s472
      %p484 = scmp.eq.s32.totalorder %s49, 3
      %p485 = por %p483, %p484
      %p487 = scmp.ne.s32.totalorder %s472, %s486
      %p488 = scmp.eq.s32.totalorder %s49, 0
      %p489 = por %p487, %p488
      %s491 = sadd.s32 %s490, 1
      %p494 = scmp.eq.s32.totalorder %s43, 3
      %p495 = scmp.ne.s32.totalorder %s490, %s492
      %p496 = scmp.eq.s32.totalorder %s43, 0
      %p497 = por %p495, %p496
      %p498 = scmp.ne.s32.totalorder %s490, %s492
      %p499 = scmp.eq.s32.totalorder %s48, 3
      %p500 = por %p498, %p499
      %p501 = scmp.ne.s32.totalorder %s492, %s493
      %p502 = scmp.eq.s32.totalorder %s48, 0
      %p503 = por %p501, %p502
      %p504 = scmp.ne.s32.totalorder %s492, %s493
      %p505 = scmp.eq.s32.totalorder %s49, 3
      %p506 = por %p504, %p505
      %p508 = scmp.ne.s32.totalorder %s493, %s507
      %p509 = scmp.eq.s32.totalorder %s49, 0
      %p510 = por %p508, %p509
      %s512 = sadd.s32 %s511, 1
      %p515 = scmp.eq.s32.totalorder %s43, 3
      %p516 = scmp.ne.s32.totalorder %s511, %s513
      %p517 = scmp.eq.s32.totalorder %s43, 0
      %p518 = por %p516, %p517
      %p519 = scmp.ne.s32.totalorder %s511, %s513
      %p520 = scmp.eq.s32.totalorder %s48, 3
      %p521 = por %p519, %p520
      %p522 = scmp.ne.s32.totalorder %s513, %s514
      %p523 = scmp.eq.s32.totalorder %s48, 0
      %p524 = por %p522, %p523
      %p525 = scmp.ne.s32.totalorder %s513, %s514
      %p526 = scmp.eq.s32.totalorder %s49, 3
      %p527 = por %p525, %p526
      %p529 = scmp.ne.s32.totalorder %s514, %s528
      %p530 = scmp.eq.s32.totalorder %s49, 0
      %p531 = por %p529, %p530
      %s533 = sadd.s32 %s532, 1
      %p536 = scmp.eq.s32.totalorder %s43, 3
      %p537 = scmp.ne.s32.totalorder %s532, %s534
      %p538 = scmp.eq.s32.totalorder %s43, 0
      %p539 = por %p537, %p538
      %p540 = scmp.ne.s32.totalorder %s532, %s534
      %p541 = scmp.eq.s32.totalorder %s48, 3
      %p542 = por %p540, %p541
      %p543 = scmp.ne.s32.totalorder %s534, %s535
      %p544 = scmp.eq.s32.totalorder %s48, 0
      %p545 = por %p543, %p544
      %p546 = scmp.ne.s32.totalorder %s534, %s535
      %p547 = scmp.eq.s32.totalorder %s49, 3
      %p548 = por %p546, %p547
      %p550 = scmp.ne.s32.totalorder %s535, %s549
      %p551 = scmp.eq.s32.totalorder %s49, 0
      %p552 = por %p550, %p551
      %s553 = ssub.s32 %s50, %s62
      %p554 = scmp.eq.s32.totalorder %s553, 0
      %s556 = sadd.s32 %s555, 1
      %s557 = scalar_select %p554, %s555, %s556
      %p560 = pneg %p554
      %p561 = scmp.eq.s32.totalorder %s43, 3
      %p562 = por %p560, %p561
      %p563 = scmp.ne.s32.totalorder %s555, %s558
      %p564 = scmp.eq.s32.totalorder %s43, 0
      %p565 = por %p563, %p564
      %p566 = scmp.ne.s32.totalorder %s555, %s558
      %p567 = scmp.eq.s32.totalorder %s48, 3
      %p568 = por %p566, %p567
      %p569 = scmp.ne.s32.totalorder %s558, %s559
      %p570 = scmp.eq.s32.totalorder %s48, 0
      %p571 = por %p569, %p570
      %p572 = scmp.ne.s32.totalorder %s558, %s559
      %p573 = scmp.eq.s32.totalorder %s49, 3
      %p574 = por %p572, %p573
      %p576 = scmp.ne.s32.totalorder %s559, %s575
      %p577 = scmp.eq.s32.totalorder %s49, 0
      %p578 = por %p576, %p577
      %s579 = ssub.s32 %s50, %s62
      %p580 = scmp.eq.s32.totalorder %s579, 0
      %s582 = sadd.s32 %s581, 1
      %s583 = scalar_select %p580, %s581, %s582
      %p586 = pneg %p580
      %p587 = scmp.eq.s32.totalorder %s43, 3
      %p588 = por %p586, %p587
      %p589 = scmp.ne.s32.totalorder %s581, %s584
      %p590 = scmp.eq.s32.totalorder %s43, 0
      %p591 = por %p589, %p590
      %p592 = scmp.ne.s32.totalorder %s581, %s584
      %p593 = scmp.eq.s32.totalorder %s48, 3
      %p594 = por %p592, %p593
      %p595 = scmp.ne.s32.totalorder %s584, %s585
      %p596 = scmp.eq.s32.totalorder %s48, 0
      %p597 = por %p595, %p596
      %p598 = scmp.ne.s32.totalorder %s584, %s585
      %p599 = scmp.eq.s32.totalorder %s49, 3
      %p600 = por %p598, %p599
      %p602 = scmp.ne.s32.totalorder %s585, %s601
      %p603 = scmp.eq.s32.totalorder %s49, 0
      %p604 = por %p602, %p603
      %p605 = scmp.le.s32.totalorder 1, %s43
      %p606 = scmp.lt.s32.totalorder %s43, 5
      %p607 = pnand %p605, %p606
      %p608 = pneg %p607
      // Predicated region
      $region9: #{tpu_custom_call.1} parent=5 // pred_check
        _
      $region10: #{tpu_custom_call.1} parent=5 // pred_check_branch
        %610 = sbr.rel (%p607) target = $region12
      $region11: #{tpu_custom_call.1} parent=5 // pred_region
        %s611 = ssub.s32 %s43, 1
        // Predicated region
        $region13: #{tpu_custom_call.1} parent=11 // pred_check
          %p612 = pneg %p128
        $region14: #{tpu_custom_call.1} parent=11 // pred_check_branch
          %614 = sbr.rel (%p612) target = $region16
        $region15: #{tpu_custom_call.1} parent=11 // pred_region
          %s616 = ssub.s32 16, 16
          %617 = vsyncadd [#allocation7], %s616
          %s619 = sshll.u32 [#allocation8], 4
          %s620 = int_to_ptr.vmem [resolvable:$true] %s619
          %622 = dma.hbm_to_vmem [thread:$0]  %s2, 16, %s620, [#allocation7]
        $region16: #{tpu_custom_call.1} parent=11 // pred_fallthru
          _
        // Predicated region
        $region17: #{tpu_custom_call.1} parent=11 // pred_check
          %p623 = pneg %p149
        $region18: #{tpu_custom_call.1} parent=11 // pred_check_branch
          %625 = sbr.rel (%p623) target = $region20
        $region19: #{tpu_custom_call.1} parent=11 // pred_region
          %s627 = ssub.s32 16, 16
          %628 = vsyncadd [#allocation10], %s627
          %s630 = sshll.u32 [#allocation9], 4
          %s631 = int_to_ptr.vmem [resolvable:$true] %s630
          %633 = dma.hbm_to_vmem [thread:$0]  %s3, 16, %s631, [#allocation10]
        $region20: #{tpu_custom_call.1} parent=11 // pred_fallthru
          _
        // Predicated region
        $region21: #{tpu_custom_call.1} parent=11 // pred_check
          %p634 = pneg %p482
        $region22: #{tpu_custom_call.1} parent=11 // pred_check_branch
          %636 = sbr.rel (%p634) target = $region24
        $region23: #{tpu_custom_call.1} parent=11 // pred_region
          %s638 = ssub.s32 256, 256
          %639 = vsyncadd [#allocation10], %s638
          %s640 = sshll.u32 [#allocation23], 4
          %s641 = int_to_ptr.vmem [resolvable:$true] %s640
          %646 = dma.hbm_to_vmem [thread:$0]  %s16, 256, %s641, [#allocation10], 64, 64, 4
        $region24: #{tpu_custom_call.1} parent=11 // pred_fallthru
          _
        // Predicated region
        $region25: #{tpu_custom_call.1} parent=11 // pred_check
          %p647 = pneg %p503
        $region26: #{tpu_custom_call.1} parent=11 // pred_check_branch
          %649 = sbr.rel (%p647) target = $region28
        $region27: #{tpu_custom_call.1} parent=11 // pred_region
          %s651 = ssub.s32 16, 16
          %652 = vsyncadd [#allocation25], %s651
          %s654 = sshll.u32 [#allocation24], 4
          %s655 = int_to_ptr.vmem [resolvable:$true] %s654
          %657 = dma.hbm_to_vmem [thread:$0]  %s17, 16, %s655, [#allocation25]
        $region28: #{tpu_custom_call.1} parent=11 // pred_fallthru
          _
        // Predicated region
        $region29: #{tpu_custom_call.1} parent=11 // pred_check
          %p658 = pneg %p524
        $region30: #{tpu_custom_call.1} parent=11 // pred_check_branch
          %660 = sbr.rel (%p658) target = $region32
        $region31: #{tpu_custom_call.1} parent=11 // pred_region
          %s662 = ssub.s32 256, 256
          %663 = vsyncadd [#allocation25], %s662
          %s664 = sshll.u32 [#allocation26], 4
          %s665 = int_to_ptr.vmem [resolvable:$true] %s664
          %670 = dma.hbm_to_vmem [thread:$0]  %s18, 256, %s665, [#allocation25], 64, 64, 4
        $region32: #{tpu_custom_call.1} parent=11 // pred_fallthru
          _
        // Predicated region
        $region33: #{tpu_custom_call.1} parent=11 // pred_check
          %p671 = pneg %p545
        $region34: #{tpu_custom_call.1} parent=11 // pred_check_branch
          %673 = sbr.rel (%p671) target = $region36
        $region35: #{tpu_custom_call.1} parent=11 // pred_region
          %s675 = ssub.s32 16, 16
          %676 = vsyncadd [#allocation28], %s675
          %s678 = sshll.u32 [#allocation27], 4
          %s679 = int_to_ptr.vmem [resolvable:$true] %s678
          %681 = dma.hbm_to_vmem [thread:$0]  %s19, 16, %s679, [#allocation28]
        $region36: #{tpu_custom_call.1} parent=11 // pred_fallthru
          _
      $region12: #{tpu_custom_call.1} parent=5 // pred_fallthru
        _
      %p682 = scmp.lt.s32.totalorder %s43, 4
      // Predicated region
      $region37: #{tpu_custom_call.1} parent=5 // pred_check
        %p683 = pneg %p682
      $region38: #{tpu_custom_call.1} parent=5 // pred_check_branch
        %685 = sbr.rel (%p683) target = $region40
      $region39: #{tpu_custom_call.1} parent=5 // pred_region
        // Predicated region
        $region41: #{tpu_custom_call.1} parent=39 // pred_check
          %p686 = pneg %p75
        $region42: #{tpu_custom_call.1} parent=39 // pred_check_branch
          %688 = sbr.rel (%p686) target = $region44
        $region43: #{tpu_custom_call.1} parent=39 // pred_region
          %s689 = sand.u32 %s43, 1
          %s690 = scalar_lea.sflag [#allocation4], %s689
          %s691 = sand.u32 %s65, 1
          %s692 = smul.addr %s691, 8
          %s693 = scalar_lea.vmem [#allocation3], %s692
          %s695 = ssub.s32 128, 128
          %696 = vsyncadd %s690, %s695
          %s697 = smul.addr %s50, 128
          %s698 = scalar_lea.hbm %s0, %s697
          %s700 = sshll.u32 %s693, 4
          %s701 = int_to_ptr.vmem [resolvable:$true] %s700
          %703 = dma.hbm_to_vmem [thread:$0]  %s698, 128, %s701, %s690
        $region44: #{tpu_custom_call.1} parent=39 // pred_fallthru
          _
        // Predicated region
        $region45: #{tpu_custom_call.1} parent=39 // pred_check
          %p704 = pneg %p101
        $region46: #{tpu_custom_call.1} parent=39 // pred_check_branch
          %706 = sbr.rel (%p704) target = $region48
        $region47: #{tpu_custom_call.1} parent=39 // pred_region
          %s707 = sand.u32 %s43, 1
          %s708 = scalar_lea.sflag [#allocation7], %s707
          %s709 = sand.u32 %s91, 1
          %s710 = scalar_lea.vmem [#allocation6], %s709
          %s712 = ssub.s32 16, 16
          %713 = vsyncadd %s708, %s712
          %s714 = smul.addr %s50, 16
          %s715 = scalar_lea.hbm %s1, %s714
          %s717 = sshll.u32 %s710, 4
          %s718 = int_to_ptr.vmem [resolvable:$true] %s717
          %720 = dma.hbm_to_vmem [thread:$0]  %s715, 16, %s718, %s708
        $region48: #{tpu_custom_call.1} parent=39 // pred_fallthru
          _
        // Predicated region
        $region49: #{tpu_custom_call.1} parent=39 // pred_check
          %p721 = pneg %p169
        $region50: #{tpu_custom_call.1} parent=39 // pred_check_branch
          %723 = sbr.rel (%p721) target = $region52
        $region51: #{tpu_custom_call.1} parent=39 // pred_region
          %s724 = sand.u32 %s43, 1
          %s725 = scalar_lea.sflag [#allocation4], %s724
          %s726 = sand.u32 %s159, 1
          %s727 = smul.addr %s726, 16
          %s728 = scalar_lea.vmem [#allocation11], %s727
          %s730 = ssub.s32 256, 256
          %731 = vsyncadd %s725, %s730
          %s732 = smul.addr %s51, 4
          %s733 = smul.addr %s732, 64
          %s734 = scalar_lea.hbm %s4, %s733
          %s735 = sshll.u32 %s728, 4
          %s736 = int_to_ptr.vmem [resolvable:$true] %s735
          %741 = dma.hbm_to_vmem [thread:$0]  %s734, 256, %s736, %s725, 64, 64, 4
        $region52: #{tpu_custom_call.1} parent=39 // pred_fallthru
          _
        // Predicated region
        $region53: #{tpu_custom_call.1} parent=39 // pred_check
          %p742 = pneg %p195
        $region54: #{tpu_custom_call.1} parent=39 // pred_check_branch
          %744 = sbr.rel (%p742) target = $region56
        $region55: #{tpu_custom_call.1} parent=39 // pred_region
          %s745 = sand.u32 %s43, 1
          %s746 = scalar_lea.sflag [#allocation7], %s745
          %s747 = sand.u32 %s185, 1
          %s748 = scalar_lea.vmem [#allocation12], %s747
          %s750 = ssub.s32 16, 16
          %751 = vsyncadd %s746, %s750
          %s752 = smul.addr %s51, 16
          %s753 = scalar_lea.hbm %s5, %s752
          %s755 = sshll.u32 %s748, 4
          %s756 = int_to_ptr.vmem [resolvable:$true] %s755
          %758 = dma.hbm_to_vmem [thread:$0]  %s753, 16, %s756, %s746
        $region56: #{tpu_custom_call.1} parent=39 // pred_fallthru
          _
        // Predicated region
        $region57: #{tpu_custom_call.1} parent=39 // pred_check
          %p759 = pneg %p221
        $region58: #{tpu_custom_call.1} parent=39 // pred_check_branch
          %761 = sbr.rel (%p759) target = $region60
        $region59: #{tpu_custom_call.1} parent=39 // pred_region
          %s762 = sand.u32 %s43, 1
          %s763 = scalar_lea.sflag [#allocation4], %s762
          %s764 = sand.u32 %s211, 1
          %s765 = smul.addr %s764, 16
          %s766 = scalar_lea.vmem [#allocation13], %s765
          %s768 = ssub.s32 256, 256
          %769 = vsyncadd %s763, %s768
          %s770 = smul.addr %s51, 4
          %s771 = smul.addr %s770, 64
          %s772 = scalar_lea.hbm %s6, %s771
          %s773 = sshll.u32 %s766, 4
          %s774 = int_to_ptr.vmem [resolvable:$true] %s773
          %779 = dma.hbm_to_vmem [thread:$0]  %s772, 256, %s774, %s763, 64, 64, 4
        $region60: #{tpu_custom_call.1} parent=39 // pred_fallthru
          _
        // Predicated region
        $region61: #{tpu_custom_call.1} parent=39 // pred_check
          %p780 = pneg %p247
        $region62: #{tpu_custom_call.1} parent=39 // pred_check_branch
          %782 = sbr.rel (%p780) target = $region64
        $region63: #{tpu_custom_call.1} parent=39 // pred_region
          %s783 = sand.u32 %s43, 1
          %s784 = scalar_lea.sflag [#allocation7], %s783
          %s785 = sand.u32 %s237, 1
          %s786 = scalar_lea.vmem [#allocation14], %s785
          %s788 = ssub.s32 16, 16
          %789 = vsyncadd %s784, %s788
          %s790 = smul.addr %s51, 16
          %s791 = scalar_lea.hbm %s7, %s790
          %s793 = sshll.u32 %s786, 4
          %s794 = int_to_ptr.vmem [resolvable:$true] %s793
          %796 = dma.hbm_to_vmem [thread:$0]  %s791, 16, %s794, %s784
        $region64: #{tpu_custom_call.1} parent=39 // pred_fallthru
          _
        // Predicated region
        $region65: #{tpu_custom_call.1} parent=39 // pred_check
          %p797 = pneg %p273
        $region66: #{tpu_custom_call.1} parent=39 // pred_check_branch
          %799 = sbr.rel (%p797) target = $region68
        $region67: #{tpu_custom_call.1} parent=39 // pred_region
          %s800 = sand.u32 %s43, 1
          %s801 = scalar_lea.sflag [#allocation4], %s800
          %s802 = sand.u32 %s263, 1
          %s803 = scalar_lea.vmem [#allocation15], %s802
          %s805 = ssub.s32 16, 16
          %806 = vsyncadd %s801, %s805
          %s807 = smul.addr %s51, 16
          %s808 = scalar_lea.hbm %s8, %s807
          %s810 = sshll.u32 %s803, 4
          %s811 = int_to_ptr.vmem [resolvable:$true] %s810
          %813 = dma.hbm_to_vmem [thread:$0]  %s808, 16, %s811, %s801
        $region68: #{tpu_custom_call.1} parent=39 // pred_fallthru
          _
        // Predicated region
        $region69: #{tpu_custom_call.1} parent=39 // pred_check
          %p814 = pneg %p299
        $region70: #{tpu_custom_call.1} parent=39 // pred_check_branch
          %816 = sbr.rel (%p814) target = $region72
        $region71: #{tpu_custom_call.1} parent=39 // pred_region
          %s817 = sand.u32 %s43, 1
          %s818 = scalar_lea.sflag [#allocation7], %s817
          %s819 = sand.u32 %s289, 1
          %s820 = scalar_lea.vmem [#allocation16], %s819
          %s822 = ssub.s32 16, 16
          %823 = vsyncadd %s818, %s822
          %s824 = smul.addr %s51, 16
          %s825 = scalar_lea.hbm %s9, %s824
          %s827 = sshll.u32 %s820, 4
          %s828 = int_to_ptr.vmem [resolvable:$true] %s827
          %830 = dma.hbm_to_vmem [thread:$0]  %s825, 16, %s828, %s818
        $region72: #{tpu_custom_call.1} parent=39 // pred_fallthru
          _
        // Predicated region
        $region73: #{tpu_custom_call.1} parent=39 // pred_check
          %p831 = pneg %p325
        $region74: #{tpu_custom_call.1} parent=39 // pred_check_branch
          %833 = sbr.rel (%p831) target = $region76
        $region75: #{tpu_custom_call.1} parent=39 // pred_region
          %s834 = sand.u32 %s43, 1
          %s835 = scalar_lea.sflag [#allocation4], %s834
          %s836 = sand.u32 %s315, 1
          %s837 = smul.addr %s836, 16
          %s838 = scalar_lea.vmem [#allocation17], %s837
          %s840 = ssub.s32 256, 256
          %841 = vsyncadd %s835, %s840
          %s842 = smul.addr %s51, 4
          %s843 = smul.addr %s842, 64
          %s844 = scalar_lea.hbm %s10, %s843
          %s845 = sshll.u32 %s838, 4
          %s846 = int_to_ptr.vmem [resolvable:$true] %s845
          %851 = dma.hbm_to_vmem [thread:$0]  %s844, 256, %s846, %s835, 64, 64, 4
        $region76: #{tpu_custom_call.1} parent=39 // pred_fallthru
          _
        // Predicated region
        $region77: #{tpu_custom_call.1} parent=39 // pred_check
          %p852 = pneg %p351
        $region78: #{tpu_custom_call.1} parent=39 // pred_check_branch
          %854 = sbr.rel (%p852) target = $region80
        $region79: #{tpu_custom_call.1} parent=39 // pred_region
          %s855 = sand.u32 %s43, 1
          %s856 = scalar_lea.sflag [#allocation7], %s855
          %s857 = sand.u32 %s341, 1
          %s858 = scalar_lea.vmem [#allocation18], %s857
          %s860 = ssub.s32 16, 16
          %861 = vsyncadd %s856, %s860
          %s862 = smul.addr %s51, 16
          %s863 = scalar_lea.hbm %s11, %s862
          %s865 = sshll.u32 %s858, 4
          %s866 = int_to_ptr.vmem [resolvable:$true] %s865
          %868 = dma.hbm_to_vmem [thread:$0]  %s863, 16, %s866, %s856
        $region80: #{tpu_custom_call.1} parent=39 // pred_fallthru
          _
        // Predicated region
        $region81: #{tpu_custom_call.1} parent=39 // pred_check
          %p869 = pneg %p377
        $region82: #{tpu_custom_call.1} parent=39 // pred_check_branch
          %871 = sbr.rel (%p869) target = $region84
        $region83: #{tpu_custom_call.1} parent=39 // pred_region
          %s872 = sand.u32 %s43, 1
          %s873 = scalar_lea.sflag [#allocation4], %s872
          %s874 = sand.u32 %s367, 1
          %s875 = smul.addr %s874, 32
          %s876 = scalar_lea.vmem [#allocation19], %s875
          %s878 = ssub.s32 512, 512
          %879 = vsyncadd %s873, %s878
          %s880 = smul.addr %s51, 8
          %s881 = smul.addr %s880, 64
          %s882 = scalar_lea.hbm %s12, %s881
          %s883 = sshll.u32 %s876, 4
          %s884 = int_to_ptr.vmem [resolvable:$true] %s883
          %889 = dma.hbm_to_vmem [thread:$0]  %s882, 512, %s884, %s873, 64, 64, 4
        $region84: #{tpu_custom_call.1} parent=39 // pred_fallthru
          _
        // Predicated region
        $region85: #{tpu_custom_call.1} parent=39 // pred_check
          %p890 = pneg %p403
        $region86: #{tpu_custom_call.1} parent=39 // pred_check_branch
          %892 = sbr.rel (%p890) target = $region88
        $region87: #{tpu_custom_call.1} parent=39 // pred_region
          %s893 = sand.u32 %s43, 1
          %s894 = scalar_lea.sflag [#allocation7], %s893
          %s895 = sand.u32 %s393, 1
          %s896 = scalar_lea.vmem [#allocation20], %s895
          %s898 = ssub.s32 16, 16
          %899 = vsyncadd %s894, %s898
          %s900 = smul.addr %s51, 16
          %s901 = scalar_lea.hbm %s13, %s900
          %s903 = sshll.u32 %s896, 4
          %s904 = int_to_ptr.vmem [resolvable:$true] %s903
          %906 = dma.hbm_to_vmem [thread:$0]  %s901, 16, %s904, %s894
        $region88: #{tpu_custom_call.1} parent=39 // pred_fallthru
          _
        // Predicated region
        $region89: #{tpu_custom_call.1} parent=39 // pred_check
          %p907 = pneg %p429
        $region90: #{tpu_custom_call.1} parent=39 // pred_check_branch
          %909 = sbr.rel (%p907) target = $region92
        $region91: #{tpu_custom_call.1} parent=39 // pred_region
          %s910 = sand.u32 %s43, 1
          %s911 = scalar_lea.sflag [#allocation4], %s910
          %s912 = sand.u32 %s419, 1
          %s913 = scalar_lea.vmem [#allocation21], %s912
          %s915 = ssub.s32 16, 16
          %916 = vsyncadd %s911, %s915
          %s917 = smul.addr %s51, 16
          %s918 = scalar_lea.hbm %s14, %s917
          %s920 = sshll.u32 %s913, 4
          %s921 = int_to_ptr.vmem [resolvable:$true] %s920
          %923 = dma.hbm_to_vmem [thread:$0]  %s918, 16, %s921, %s911
        $region92: #{tpu_custom_call.1} parent=39 // pred_fallthru
          _
        // Predicated region
        $region93: #{tpu_custom_call.1} parent=39 // pred_check
          %p924 = pneg %p455
        $region94: #{tpu_custom_call.1} parent=39 // pred_check_branch
          %926 = sbr.rel (%p924) target = $region96
        $region95: #{tpu_custom_call.1} parent=39 // pred_region
          %s927 = sand.u32 %s43, 1
          %s928 = scalar_lea.sflag [#allocation7], %s927
          %s929 = sand.u32 %s445, 1
          %s930 = scalar_lea.vmem [#allocation22], %s929
          %s932 = ssub.s32 16, 16
          %933 = vsyncadd %s928, %s932
          %s934 = smul.addr %s51, 16
          %s935 = scalar_lea.hbm %s15, %s934
          %s937 = sshll.u32 %s930, 4
          %s938 = int_to_ptr.vmem [resolvable:$true] %s937
          %940 = dma.hbm_to_vmem [thread:$0]  %s935, 16, %s938, %s928
        $region96: #{tpu_custom_call.1} parent=39 // pred_fallthru
          _
      $region40: #{tpu_custom_call.1} parent=5 // pred_fallthru
        _
      %p941 = scmp.le.s32.totalorder 1, %s43
      %p942 = scmp.lt.s32.totalorder %s43, 5
      %p943 = pnand %p941, %p942
      %p944 = pneg %p943
      // Predicated region
      $region97: #{tpu_custom_call.1} parent=5 // pred_check
        _
      $region98: #{tpu_custom_call.1} parent=5 // pred_check_branch
        %946 = sbr.rel (%p943) target = $region100
      $region99: #{tpu_custom_call.1} parent=5 // pred_region
        %s947 = ssub.s32 %s43, 1
        %s948 = sand.u32 %s48, 1
        %s949 = scalar_lea.sflag [#allocation4], %s948
        %s950 = sand.u32 %s68, 1
        %s951 = smul.addr %s950, 8
        %s952 = scalar_lea.vmem [#allocation3], %s951
        // Predicated region
        $region101: #{tpu_custom_call.1} parent=99 // pred_check
          %p953 = pneg %p81
        $region102: #{tpu_custom_call.1} parent=99 // pred_check_branch
          %955 = sbr.rel (%p953) target = $region104
        $region103: #{tpu_custom_call.1} parent=99 // pred_region
          %956 = dma.done %s949, 128
        $region104: #{tpu_custom_call.1} parent=99 // pred_fallthru
          _
        %s957 = sand.u32 %s48, 1
        %s958 = scalar_lea.sflag [#allocation7], %s957
        %s959 = sand.u32 %s94, 1
        %s960 = scalar_lea.vmem [#allocation6], %s959
        // Predicated region
        $region105: #{tpu_custom_call.1} parent=99 // pred_check
          %p961 = pneg %p107
        $region106: #{tpu_custom_call.1} parent=99 // pred_check_branch
          %963 = sbr.rel (%p961) target = $region108
        $region107: #{tpu_custom_call.1} parent=99 // pred_region
          %964 = dma.done %s958, 16
        $region108: #{tpu_custom_call.1} parent=99 // pred_fallthru
          _
        // Predicated region
        $region109: #{tpu_custom_call.1} parent=99 // pred_check
          %p965 = pneg %p128
        $region110: #{tpu_custom_call.1} parent=99 // pred_check_branch
          %967 = sbr.rel (%p965) target = $region112
        $region111: #{tpu_custom_call.1} parent=99 // pred_region
          %968 = dma.done [#allocation7], 16
        $region112: #{tpu_custom_call.1} parent=99 // pred_fallthru
          _
        // Predicated region
        $region113: #{tpu_custom_call.1} parent=99 // pred_check
          %p969 = pneg %p149
        $region114: #{tpu_custom_call.1} parent=99 // pred_check_branch
          %971 = sbr.rel (%p969) target = $region116
        $region115: #{tpu_custom_call.1} parent=99 // pred_region
          %972 = dma.done [#allocation10], 16
        $region116: #{tpu_custom_call.1} parent=99 // pred_fallthru
          _
        %s973 = sand.u32 %s48, 1
        %s974 = scalar_lea.sflag [#allocation4], %s973
        %s975 = sand.u32 %s162, 1
        %s976 = smul.addr %s975, 16
        %s977 = scalar_lea.vmem [#allocation11], %s976
        // Predicated region
        $region117: #{tpu_custom_call.1} parent=99 // pred_check
          %p978 = pneg %p175
        $region118: #{tpu_custom_call.1} parent=99 // pred_check_branch
          %980 = sbr.rel (%p978) target = $region120
        $region119: #{tpu_custom_call.1} parent=99 // pred_region
          %981 = dma.done %s974, 256
        $region120: #{tpu_custom_call.1} parent=99 // pred_fallthru
          _
        %s982 = sand.u32 %s48, 1
        %s983 = scalar_lea.sflag [#allocation7], %s982
        %s984 = sand.u32 %s188, 1
        %s985 = scalar_lea.vmem [#allocation12], %s984
        // Predicated region
        $region121: #{tpu_custom_call.1} parent=99 // pred_check
          %p986 = pneg %p201
        $region122: #{tpu_custom_call.1} parent=99 // pred_check_branch
          %988 = sbr.rel (%p986) target = $region124
        $region123: #{tpu_custom_call.1} parent=99 // pred_region
          %989 = dma.done %s983, 16
        $region124: #{tpu_custom_call.1} parent=99 // pred_fallthru
          _
        %s990 = sand.u32 %s48, 1
        %s991 = scalar_lea.sflag [#allocation4], %s990
        %s992 = sand.u32 %s214, 1
        %s993 = smul.addr %s992, 16
        %s994 = scalar_lea.vmem [#allocation13], %s993
        // Predicated region
        $region125: #{tpu_custom_call.1} parent=99 // pred_check
          %p995 = pneg %p227
        $region126: #{tpu_custom_call.1} parent=99 // pred_check_branch
          %997 = sbr.rel (%p995) target = $region128
        $region127: #{tpu_custom_call.1} parent=99 // pred_region
          %998 = dma.done %s991, 256
        $region128: #{tpu_custom_call.1} parent=99 // pred_fallthru
          _
        %s999 = sand.u32 %s48, 1
        %s1000 = scalar_lea.sflag [#allocation7], %s999
        %s1001 = sand.u32 %s240, 1
        %s1002 = scalar_lea.vmem [#allocation14], %s1001
        // Predicated region
        $region129: #{tpu_custom_call.1} parent=99 // pred_check
          %p1003 = pneg %p253
        $region130: #{tpu_custom_call.1} parent=99 // pred_check_branch
          %1005 = sbr.rel (%p1003) target = $region132
        $region131: #{tpu_custom_call.1} parent=99 // pred_region
          %1006 = dma.done %s1000, 16
        $region132: #{tpu_custom_call.1} parent=99 // pred_fallthru
          _
        %s1007 = sand.u32 %s48, 1
        %s1008 = scalar_lea.sflag [#allocation4], %s1007
        %s1009 = sand.u32 %s266, 1
        %s1010 = scalar_lea.vmem [#allocation15], %s1009
        // Predicated region
        $region133: #{tpu_custom_call.1} parent=99 // pred_check
          %p1011 = pneg %p279
        $region134: #{tpu_custom_call.1} parent=99 // pred_check_branch
          %1013 = sbr.rel (%p1011) target = $region136
        $region135: #{tpu_custom_call.1} parent=99 // pred_region
          %1014 = dma.done %s1008, 16
        $region136: #{tpu_custom_call.1} parent=99 // pred_fallthru
          _
        %s1015 = sand.u32 %s48, 1
        %s1016 = scalar_lea.sflag [#allocation7], %s1015
        %s1017 = sand.u32 %s292, 1
        %s1018 = scalar_lea.vmem [#allocation16], %s1017
        // Predicated region
        $region137: #{tpu_custom_call.1} parent=99 // pred_check
          %p1019 = pneg %p305
        $region138: #{tpu_custom_call.1} parent=99 // pred_check_branch
          %1021 = sbr.rel (%p1019) target = $region140
        $region139: #{tpu_custom_call.1} parent=99 // pred_region
          %1022 = dma.done %s1016, 16
        $region140: #{tpu_custom_call.1} parent=99 // pred_fallthru
          _
        %s1023 = sand.u32 %s48, 1
        %s1024 = scalar_lea.sflag [#allocation4], %s1023
        %s1025 = sand.u32 %s318, 1
        %s1026 = smul.addr %s1025, 16
        %s1027 = scalar_lea.vmem [#allocation17], %s1026
        // Predicated region
        $region141: #{tpu_custom_call.1} parent=99 // pred_check
          %p1028 = pneg %p331
        $region142: #{tpu_custom_call.1} parent=99 // pred_check_branch
          %1030 = sbr.rel (%p1028) target = $region144
        $region143: #{tpu_custom_call.1} parent=99 // pred_region
          %1031 = dma.done %s1024, 256
        $region144: #{tpu_custom_call.1} parent=99 // pred_fallthru
          _
        %s1032 = sand.u32 %s48, 1
        %s1033 = scalar_lea.sflag [#allocation7], %s1032
        %s1034 = sand.u32 %s344, 1
        %s1035 = scalar_lea.vmem [#allocation18], %s1034
        // Predicated region
        $region145: #{tpu_custom_call.1} parent=99 // pred_check
          %p1036 = pneg %p357
        $region146: #{tpu_custom_call.1} parent=99 // pred_check_branch
          %1038 = sbr.rel (%p1036) target = $region148
        $region147: #{tpu_custom_call.1} parent=99 // pred_region
          %1039 = dma.done %s1033, 16
        $region148: #{tpu_custom_call.1} parent=99 // pred_fallthru
          _
        %s1040 = sand.u32 %s48, 1
        %s1041 = scalar_lea.sflag [#allocation4], %s1040
        %s1042 = sand.u32 %s370, 1
        %s1043 = smul.addr %s1042, 32
        %s1044 = scalar_lea.vmem [#allocation19], %s1043
        // Predicated region
        $region149: #{tpu_custom_call.1} parent=99 // pred_check
          %p1045 = pneg %p383
        $region150: #{tpu_custom_call.1} parent=99 // pred_check_branch
          %1047 = sbr.rel (%p1045) target = $region152
        $region151: #{tpu_custom_call.1} parent=99 // pred_region
          %1048 = dma.done %s1041, 512
        $region152: #{tpu_custom_call.1} parent=99 // pred_fallthru
          _
        %s1049 = sand.u32 %s48, 1
        %s1050 = scalar_lea.sflag [#allocation7], %s1049
        %s1051 = sand.u32 %s396, 1
        %s1052 = scalar_lea.vmem [#allocation20], %s1051
        // Predicated region
        $region153: #{tpu_custom_call.1} parent=99 // pred_check
          %p1053 = pneg %p409
        $region154: #{tpu_custom_call.1} parent=99 // pred_check_branch
          %1055 = sbr.rel (%p1053) target = $region156
        $region155: #{tpu_custom_call.1} parent=99 // pred_region
          %1056 = dma.done %s1050, 16
        $region156: #{tpu_custom_call.1} parent=99 // pred_fallthru
          _
        %s1057 = sand.u32 %s48, 1
        %s1058 = scalar_lea.sflag [#allocation4], %s1057
        %s1059 = sand.u32 %s422, 1
        %s1060 = scalar_lea.vmem [#allocation21], %s1059
        // Predicated region
        $region157: #{tpu_custom_call.1} parent=99 // pred_check
          %p1061 = pneg %p435
        $region158: #{tpu_custom_call.1} parent=99 // pred_check_branch
          %1063 = sbr.rel (%p1061) target = $region160
        $region159: #{tpu_custom_call.1} parent=99 // pred_region
          %1064 = dma.done %s1058, 16
        $region160: #{tpu_custom_call.1} parent=99 // pred_fallthru
          _
        %s1065 = sand.u32 %s48, 1
        %s1066 = scalar_lea.sflag [#allocation7], %s1065
        %s1067 = sand.u32 %s448, 1
        %s1068 = scalar_lea.vmem [#allocation22], %s1067
        // Predicated region
        $region161: #{tpu_custom_call.1} parent=99 // pred_check
          %p1069 = pneg %p461
        $region162: #{tpu_custom_call.1} parent=99 // pred_check_branch
          %1071 = sbr.rel (%p1069) target = $region164
        $region163: #{tpu_custom_call.1} parent=99 // pred_region
          %1072 = dma.done %s1066, 16
        $region164: #{tpu_custom_call.1} parent=99 // pred_fallthru
          _
        // Predicated region
        $region165: #{tpu_custom_call.1} parent=99 // pred_check
          %p1073 = pneg %p482
        $region166: #{tpu_custom_call.1} parent=99 // pred_check_branch
          %1075 = sbr.rel (%p1073) target = $region168
        $region167: #{tpu_custom_call.1} parent=99 // pred_region
          %1076 = dma.done [#allocation10], 256
        $region168: #{tpu_custom_call.1} parent=99 // pred_fallthru
          _
        // Predicated region
        $region169: #{tpu_custom_call.1} parent=99 // pred_check
          %p1077 = pneg %p503
        $region170: #{tpu_custom_call.1} parent=99 // pred_check_branch
          %1079 = sbr.rel (%p1077) target = $region172
        $region171: #{tpu_custom_call.1} parent=99 // pred_region
          %1080 = dma.done [#allocation25], 16
        $region172: #{tpu_custom_call.1} parent=99 // pred_fallthru
          _
        // Predicated region
        $region173: #{tpu_custom_call.1} parent=99 // pred_check
          %p1081 = pneg %p524
        $region174: #{tpu_custom_call.1} parent=99 // pred_check_branch
          %1083 = sbr.rel (%p1081) target = $region176
        $region175: #{tpu_custom_call.1} parent=99 // pred_region
          %1084 = dma.done [#allocation25], 256
        $region176: #{tpu_custom_call.1} parent=99 // pred_fallthru
          _
        // Predicated region
        $region177: #{tpu_custom_call.1} parent=99 // pred_check
          %p1085 = pneg %p545
        $region178: #{tpu_custom_call.1} parent=99 // pred_check_branch
          %1087 = sbr.rel (%p1085) target = $region180
        $region179: #{tpu_custom_call.1} parent=99 // pred_region
          %1088 = dma.done [#allocation28], 16
        $region180: #{tpu_custom_call.1} parent=99 // pred_fallthru
          _
        %s1089 = sand.u32 %s48, 1
        %s1090 = scalar_lea.sflag [#allocation4], %s1089
        %s1091 = sand.u32 %s68, 1
        %s1092 = smul.addr %s1091, 8
        %s1093 = scalar_lea.vmem [#allocation3], %s1092
        %p1094 = pneg %p81
        %p1095 = pneg %p78
        %s1096 = sand.u32 %s48, 1
        %s1097 = scalar_lea.sflag [#allocation7], %s1096
        %s1098 = sand.u32 %s94, 1
        %s1099 = scalar_lea.vmem [#allocation6], %s1098
        %p1100 = pneg %p107
        %p1101 = pneg %p104
        %p1102 = pneg %p128
        %p1103 = pneg %p125
        %p1104 = pneg %p149
        %p1105 = pneg %p146
        %s1106 = sand.u32 %s48, 1
        %s1107 = scalar_lea.sflag [#allocation4], %s1106
        %s1108 = sand.u32 %s162, 1
        %s1109 = smul.addr %s1108, 16
        %s1110 = scalar_lea.vmem [#allocation11], %s1109
        %p1111 = pneg %p175
        %p1112 = pneg %p172
        %s1113 = sand.u32 %s48, 1
        %s1114 = scalar_lea.sflag [#allocation7], %s1113
        %s1115 = sand.u32 %s188, 1
        %s1116 = scalar_lea.vmem [#allocation12], %s1115
        %p1117 = pneg %p201
        %p1118 = pneg %p198
        %s1119 = sand.u32 %s48, 1
        %s1120 = scalar_lea.sflag [#allocation4], %s1119
        %s1121 = sand.u32 %s214, 1
        %s1122 = smul.addr %s1121, 16
        %s1123 = scalar_lea.vmem [#allocation13], %s1122
        %p1124 = pneg %p227
        %p1125 = pneg %p224
        %s1126 = sand.u32 %s48, 1
        %s1127 = scalar_lea.sflag [#allocation7], %s1126
        %s1128 = sand.u32 %s240, 1
        %s1129 = scalar_lea.vmem [#allocation14], %s1128
        %p1130 = pneg %p253
        %p1131 = pneg %p250
        %s1132 = sand.u32 %s48, 1
        %s1133 = scalar_lea.sflag [#allocation4], %s1132
        %s1134 = sand.u32 %s266, 1
        %s1135 = scalar_lea.vmem [#allocation15], %s1134
        %p1136 = pneg %p279
        %p1137 = pneg %p276
        %s1138 = sand.u32 %s48, 1
        %s1139 = scalar_lea.sflag [#allocation7], %s1138
        %s1140 = sand.u32 %s292, 1
        %s1141 = scalar_lea.vmem [#allocation16], %s1140
        %p1142 = pneg %p305
        %p1143 = pneg %p302
        %s1144 = sand.u32 %s48, 1
        %s1145 = scalar_lea.sflag [#allocation4], %s1144
        %s1146 = sand.u32 %s318, 1
        %s1147 = smul.addr %s1146, 16
        %s1148 = scalar_lea.vmem [#allocation17], %s1147
        %p1149 = pneg %p331
        %p1150 = pneg %p328
        %s1151 = sand.u32 %s48, 1
        %s1152 = scalar_lea.sflag [#allocation7], %s1151
        %s1153 = sand.u32 %s344, 1
        %s1154 = scalar_lea.vmem [#allocation18], %s1153
        %p1155 = pneg %p357
        %p1156 = pneg %p354
        %s1157 = sand.u32 %s48, 1
        %s1158 = scalar_lea.sflag [#allocation4], %s1157
        %s1159 = sand.u32 %s370, 1
        %s1160 = smul.addr %s1159, 32
        %s1161 = scalar_lea.vmem [#allocation19], %s1160
        %p1162 = pneg %p383
        %p1163 = pneg %p380
        %s1164 = sand.u32 %s48, 1
        %s1165 = scalar_lea.sflag [#allocation7], %s1164
        %s1166 = sand.u32 %s396, 1
        %s1167 = scalar_lea.vmem [#allocation20], %s1166
        %p1168 = pneg %p409
        %p1169 = pneg %p406
        %s1170 = sand.u32 %s48, 1
        %s1171 = scalar_lea.sflag [#allocation4], %s1170
        %s1172 = sand.u32 %s422, 1
        %s1173 = scalar_lea.vmem [#allocation21], %s1172
        %p1174 = pneg %p435
        %p1175 = pneg %p432
        %s1176 = sand.u32 %s48, 1
        %s1177 = scalar_lea.sflag [#allocation7], %s1176
        %s1178 = sand.u32 %s448, 1
        %s1179 = scalar_lea.vmem [#allocation22], %s1178
        %p1180 = pneg %p461
        %p1181 = pneg %p458
        %p1182 = pneg %p482
        %p1183 = pneg %p479
        %p1184 = pneg %p503
        %p1185 = pneg %p500
        %p1186 = pneg %p524
        %p1187 = pneg %p521
        %p1188 = pneg %p545
        %p1189 = pneg %p542
        %p1190 = pneg %p571
        %p1191 = pneg %p568
        %s1192 = sand.u32 %s558, 1
        %s1193 = scalar_lea.sflag [#allocation5], %s1192
        %s1194 = sand.u32 %s558, 1
        %s1195 = smul.addr %s1194, 8
        %s1196 = scalar_lea.vmem [#allocation29], %s1195
        %p1197 = pneg %p597
        %p1198 = pneg %p594
        %s1199 = sand.u32 %s584, 1
        %s1200 = scalar_lea.sflag [#allocation31], %s1199
        %s1201 = sand.u32 %s584, 1
        %s1202 = scalar_lea.vmem [#allocation30], %s1201
        %p1204 = scmp.eq.s32.totalorder %s53, 0
        // Predicated region
        $region181: #{tpu_custom_call.1} parent=99 // pred_check
          %p1205 = pneg %p1204
        $region182: #{tpu_custom_call.1} parent=99 // pred_check_branch
          %1207 = sbr.rel (%p1205) target = $region184
        $region183: #{tpu_custom_call.1} parent=99 // pred_region
          %v1208 = vld [vmem:[%s952] sm:$0xff]
          %v1209 = vld [vmem:[#allocation8] sm:$0x1]
          %v1210 = vld [vmem:[#allocation9] sm:$0x1]
          %vm1211 = vcmask 261120
          %v1212 = vsel %vm1211, %v1208, 0.0
          %1213 = vadd.xlane.f32.xlu0 %v1212
          %v1214 = vpop.xlane.xlu0 %1213
          %v1215 = vrcp.pop 32.0
          %v1216 = vmul.f32 %v1214, %v1215
          %v1217 = vsub.f32 %v1208, %v1216
          %v1218 = vmul.f32 %v1217, %v1217
          %v1219 = vsel %vm1211, %v1218, 0.0
          %1220 = vadd.xlane.f32.xlu0 %v1219
          %v1221 = vpop.xlane.xlu0 %1220
          %v1222 = vmul.f32 %v1221, %v1215
          %v1223 = vadd.f32 %v1222, 1e-12
          %v1224 = vrsqrt.pop %v1223
          %v1225 = vmul.f32 %v1217, %v1224
          %v1227 = vlaneseq
          %v1228 = vshrl.u32 %v1227, 7
          %v1229 = vsub.s32 0, %v1228
          %v1230 = vrot.slane %v1209, %v1229
          %v1232 = vmul.f32 %v1225, %v1230
          %v1234 = vlaneseq
          %v1235 = vshrl.u32 %v1234, 7
          %v1236 = vsub.s32 0, %v1235
          %v1237 = vrot.slane %v1210, %v1236
          %v1239 = vadd.f32 %v1232, %v1237
          %1240 = vst.msk [vmem:[#allocation2] sm:$0xff] %vm1211, %v1239
        $region184: #{tpu_custom_call.1} parent=99 // pred_fallthru
          _
        %v1241 = vld [vmem:[#allocation2] sm:$0xff]
        %v1242 = vld [vmem:[%s960] sm:$0x1]
        %v1243 = vpack.c.bf16 %v1241, %v1241
        %v1244 = vld [vmem:[%s977] sm:$0xf]
        %v1245 = vld [vmem:[%s977 + $0x4] sm:$0xf]
        %v1246 = vld [vmem:[%s977 + $0x8] sm:$0xf]
        %v1247 = vld [vmem:[%s977 + $0xc] sm:$0xf]
        %v1248 = vld [vmem:[%s985] sm:$0x1]
        %v1250 = vlaneseq
        %v1251 = vshrl.u32 %v1250, 7
        %v1252 = vsub.s32 0, %v1251
        %v1253 = vrot.slane %v1248, %v1252
        %v1259 = vunpack.c.l.b16 %v1244
        %v1260 = vunpack.c.l.b16 %v1245
        %v1261 = vunpack.c.l.b16 %v1246
        %v1262 = vunpack.c.l.b16 %v1247
        %v1263 = vpack.c.b16 %v1260, %v1259
        %v1264 = vpack.c.b16 %v1262, %v1261
        %vm1267 = vcmask 261120
        %v1269 = vsel %vm1267, %v1243, 0
        %1271 = vmatprep.subr.bf16.mxu0 0
        %1272 = vmatpush1.bf16.msra.mxu0 %v1263
        %1273 = vmatprep.subr.bf16.mxu0 0
        %1274 = vmatpush1.bf16.msra.mxu0 %v1264
        %1275 = vmatprep.subr.bf16.mxu0 0
        %1276 = vmatpush1.bf16.msra.mxu0 0
        %1277 = vmatprep.subr.bf16.mxu0 0
        %1278 = vmatpush1.bf16.msra.mxu0 0
        %1279 = vmatprep.subr.bf16.mxu0 0
        %1280 = vmatpush1.bf16.msra.mxu0 0
        %1281 = vmatprep.subr.bf16.mxu0 0
        %1282 = vmatpush1.bf16.msra.mxu0 0
        %1283 = vmatprep.subr.bf16.mxu0 0
        %1284 = vmatpush1.bf16.msra.mxu0 0
        %1285 = vmatprep.subr.bf16.mxu0 0
        %1286 = vmatpush1.bf16.msra.mxu0 0
        %1287 = vmatprep.subr.bf16.mxu0 0
        %1288 = vmatpush1.bf16.msra.mxu0 0
        %1289 = vmatprep.subr.bf16.mxu0 0
        %1290 = vmatpush1.bf16.msra.mxu0 0
        %1291 = vmatprep.subr.bf16.mxu0 0
        %1292 = vmatpush1.bf16.msra.mxu0 0
        %1293 = vmatprep.subr.bf16.mxu0 0
        %1294 = vmatpush1.bf16.msra.mxu0 0
        %1295 = vmatprep.subr.bf16.mxu0 0
        %1296 = vmatpush1.bf16.msra.mxu0 0
        %1297 = vmatprep.subr.bf16.mxu0 0
        %1298 = vmatpush1.bf16.msra.mxu0 0
        %1299 = vmatprep.subr.bf16.mxu0 0
        %1300 = vmatpush1.bf16.msra.mxu0 0
        %1301 = vmatprep.subr.bf16.mxu0 0
        %1302 = vmatpush1.bf16.msra.mxu0 0
        %1303 = vmatprep.mubr.bf16.mxu0 0
        %1304 = vmatmul.mubr.bf16.gmra.mrb[0].mxu0 %v1269
        %v1305 = vpop.f32.mrb[0].mxu0
        %v1306 = vadd.f32 %v1253, %v1305
        %v1307 = vpop.f32.mrb[0].mxu0
        %v1308 = vpop.f32.mrb[0].mxu0
        %v1309 = vpop.f32.mrb[0].mxu0
        %1310 = vdwg.mxu0
        %v1311 = vpack.c.bf16 %v1306, %v1306
        %1313 = vrot.lane.b32.xlu0 %v1311, 96
        %v1314 = vpop.permute.xlu0 %1313
        %vm1315 = vcmask 130048
        %v1317 = vsel %vm1315, %v1311, 0
        %v1320 = vsel %vm1315, %v1314, 0
        %1322 = vmatprep.subr.bf16.mxu0 0
        %1323 = vmatpush1.bf16.xpose.msra.mxu0 %v1320
        %1324 = vmatprep.subr.bf16.mxu0 0
        %1325 = vmatpush1.bf16.xpose.msra.mxu0 0
        %1326 = vmatprep.subr.bf16.mxu0 0
        %1327 = vmatpush1.bf16.xpose.msra.mxu0 0
        %1328 = vmatprep.subr.bf16.mxu0 0
        %1329 = vmatpush1.bf16.xpose.msra.mxu0 0
        %1330 = vmatprep.subr.bf16.mxu0 0
        %1331 = vmatpush1.bf16.xpose.msra.mxu0 0
        %1332 = vmatprep.subr.bf16.mxu0 0
        %1333 = vmatpush1.bf16.xpose.msra.mxu0 0
        %1334 = vmatprep.subr.bf16.mxu0 0
        %1335 = vmatpush1.bf16.xpose.msra.mxu0 0
        %1336 = vmatprep.subr.bf16.mxu0 0
        %1337 = vmatpush1.bf16.xpose.msra.mxu0 0
        %1338 = vmatprep.subr.bf16.mxu0 0
        %1339 = vmatpush1.bf16.xpose.msra.mxu0 0
        %1340 = vmatprep.subr.bf16.mxu0 0
        %1341 = vmatpush1.bf16.xpose.msra.mxu0 0
        %1342 = vmatprep.subr.bf16.mxu0 0
        %1343 = vmatpush1.bf16.xpose.msra.mxu0 0
        %1344 = vmatprep.subr.bf16.mxu0 0
        %1345 = vmatpush1.bf16.xpose.msra.mxu0 0
        %1346 = vmatprep.subr.bf16.mxu0 0
        %1347 = vmatpush1.bf16.xpose.msra.mxu0 0
        %1348 = vmatprep.subr.bf16.mxu0 0
        %1349 = vmatpush1.bf16.xpose.msra.mxu0 0
        %1350 = vmatprep.subr.bf16.mxu0 0
        %1351 = vmatpush1.bf16.xpose.msra.mxu0 0
        %1352 = vmatprep.subr.bf16.mxu0 0
        %1353 = vmatpush1.bf16.xpose.msra.mxu0 0
        %1354 = vmatprep.mubr.bf16.mxu0 0
        %1355 = vmatmul.mubr.bf16.gmra.mrb[0].mxu0 %v1317
        %v1356 = vpop.f32.mrb[0].mxu0
        %v1357 = vadd.f32 0.0, %v1356
        %v1358 = vpop.f32.mrb[0].mxu0
        %v1359 = vpop.f32.mrb[0].mxu0
        %v1360 = vpop.f32.mrb[0].mxu0
        %1361 = vdwg.mxu0
        %v1362 = vmul.f32 %v1357, 0.25
        %v1364 = vlaneseq
        %v1365 = vshrl.u32 %v1364, 7
        %v1366 = vsub.s32 0, %v1365
        %v1367 = vrot.slane %v1242, %v1366
        %v1369 = vadd.f32 %v1362, %v1367
        %vm1370 = vcmask 64512
        %v1371 = vsel %vm1370, %v1369, -inf
        %1372 = vmax.xlane.f32.xlu0 %v1371
        %v1373 = vpop.xlane.xlu0 %1372
        %v1374 = vsub.f32 %v1369, %v1373
        %v1375 = vmul.f32 %v1374, 1.442695
        %v1376 = vpow.pop %v1375
        %v1377 = vsel %vm1370, %v1376, 0.0
        %1378 = vadd.xlane.f32.xlu0 %v1377
        %v1379 = vpop.xlane.xlu0 %1378
        %v1380 = vrcp.pop %v1379
        %v1381 = vmul.f32 %v1376, %v1380
        %v1382 = vpack.c.bf16 %v1381, %v1381
        %1383 = vrot.lane.b32.xlu0 %v1311, 64
        %v1384 = vpop.permute.xlu0 %1383
        %v1386 = vsel %vm1370, %v1382, 0
        %vm1388 = vcmask 1043456
        %v1390 = vsel %vm1388, %v1384, 0
        %1392 = vmatprep.subr.bf16.mxu0 0
        %1393 = vmatpush1.bf16.msra.mxu0 %v1390
        %1394 = vmatprep.subr.bf16.mxu0 0
        %1395 = vmatpush1.bf16.msra.mxu0 0
        %1396 = vmatprep.subr.bf16.mxu0 0
        %1397 = vmatpush1.bf16.msra.mxu0 0
        %1398 = vmatprep.subr.bf16.mxu0 0
        %1399 = vmatpush1.bf16.msra.mxu0 0
        %1400 = vmatprep.subr.bf16.mxu0 0
        %1401 = vmatpush1.bf16.msra.mxu0 0
        %1402 = vmatprep.subr.bf16.mxu0 0
        %1403 = vmatpush1.bf16.msra.mxu0 0
        %1404 = vmatprep.subr.bf16.mxu0 0
        %1405 = vmatpush1.bf16.msra.mxu0 0
        %1406 = vmatprep.subr.bf16.mxu0 0
        %1407 = vmatpush1.bf16.msra.mxu0 0
        %1408 = vmatprep.subr.bf16.mxu0 0
        %1409 = vmatpush1.bf16.msra.mxu0 0
        %1410 = vmatprep.subr.bf16.mxu0 0
        %1411 = vmatpush1.bf16.msra.mxu0 0
        %1412 = vmatprep.subr.bf16.mxu0 0
        %1413 = vmatpush1.bf16.msra.mxu0 0
        %1414 = vmatprep.subr.bf16.mxu0 0
        %1415 = vmatpush1.bf16.msra.mxu0 0
        %1416 = vmatprep.subr.bf16.mxu0 0
        %1417 = vmatpush1.bf16.msra.mxu0 0
        %1418 = vmatprep.subr.bf16.mxu0 0
        %1419 = vmatpush1.bf16.msra.mxu0 0
        %1420 = vmatprep.subr.bf16.mxu0 0
        %1421 = vmatpush1.bf16.msra.mxu0 0
        %1422 = vmatprep.subr.bf16.mxu0 0
        %1423 = vmatpush1.bf16.msra.mxu0 0
        %1424 = vmatprep.mubr.bf16.mxu0 0
        %1425 = vmatmul.mubr.bf16.gmra.mrb[0].mxu0 %v1386
        %v1426 = vpop.f32.mrb[0].mxu0
        %v1427 = vadd.f32 0.0, %v1426
        %v1428 = vpop.f32.mrb[0].mxu0
        %v1429 = vpop.f32.mrb[0].mxu0
        %v1430 = vpop.f32.mrb[0].mxu0
        %1431 = vdwg.mxu0
        %1432 = vrot.lane.b32.xlu0 %v1311, 112
        %v1433 = vpop.permute.xlu0 %1432
        %1434 = vrot.lane.b32.xlu0 %v1311, 80
        %v1435 = vpop.permute.xlu0 %1434
        %v1437 = vsel %vm1315, %v1433, 0
        %v1440 = vsel %vm1315, %v1435, 0
        %1442 = vmatprep.subr.bf16.mxu0 0
        %1443 = vmatpush1.bf16.xpose.msra.mxu0 %v1440
        %1444 = vmatprep.subr.bf16.mxu0 0
        %1445 = vmatpush1.bf16.xpose.msra.mxu0 0
        %1446 = vmatprep.subr.bf16.mxu0 0
        %1447 = vmatpush1.bf16.xpose.msra.mxu0 0
        %1448 = vmatprep.subr.bf16.mxu0 0
        %1449 = vmatpush1.bf16.xpose.msra.mxu0 0
        %1450 = vmatprep.subr.bf16.mxu0 0
        %1451 = vmatpush1.bf16.xpose.msra.mxu0 0
        %1452 = vmatprep.subr.bf16.mxu0 0
        %1453 = vmatpush1.bf16.xpose.msra.mxu0 0
        %1454 = vmatprep.subr.bf16.mxu0 0
        %1455 = vmatpush1.bf16.xpose.msra.mxu0 0
        %1456 = vmatprep.subr.bf16.mxu0 0
        %1457 = vmatpush1.bf16.xpose.msra.mxu0 0
        %1458 = vmatprep.subr.bf16.mxu0 0
        %1459 = vmatpush1.bf16.xpose.msra.mxu0 0
        %1460 = vmatprep.subr.bf16.mxu0 0
        %1461 = vmatpush1.bf16.xpose.msra.mxu0 0
        %1462 = vmatprep.subr.bf16.mxu0 0
        %1463 = vmatpush1.bf16.xpose.msra.mxu0 0
        %1464 = vmatprep.subr.bf16.mxu0 0
        %1465 = vmatpush1.bf16.xpose.msra.mxu0 0
        %1466 = vmatprep.subr.bf16.mxu0 0
        %1467 = vmatpush1.bf16.xpose.msra.mxu0 0
        %1468 = vmatprep.subr.bf16.mxu0 0
        %1469 = vmatpush1.bf16.xpose.msra.mxu0 0
        %1470 = vmatprep.subr.bf16.mxu0 0
        %1471 = vmatpush1.bf16.xpose.msra.mxu0 0
        %1472 = vmatprep.subr.bf16.mxu0 0
        %1473 = vmatpush1.bf16.xpose.msra.mxu0 0
        %1474 = vmatprep.mubr.bf16.mxu0 0
        %1475 = vmatmul.mubr.bf16.gmra.mrb[0].mxu0 %v1437
        %v1476 = vpop.f32.mrb[0].mxu0
        %v1477 = vadd.f32 0.0, %v1476
        %v1478 = vpop.f32.mrb[0].mxu0
        %v1479 = vpop.f32.mrb[0].mxu0
        %v1480 = vpop.f32.mrb[0].mxu0
        %1481 = vdwg.mxu0
        %v1482 = vmul.f32 %v1477, 0.25
        %v1483 = vadd.f32 %v1482, %v1367
        %v1484 = vsel %vm1370, %v1483, -inf
        %1485 = vmax.xlane.f32.xlu0 %v1484
        %v1486 = vpop.xlane.xlu0 %1485
        %v1487 = vsub.f32 %v1483, %v1486
        %v1488 = vmul.f32 %v1487, 1.442695
        %v1489 = vpow.pop %v1488
        %v1490 = vsel %vm1370, %v1489, 0.0
        %1491 = vadd.xlane.f32.xlu0 %v1490
        %v1492 = vpop.xlane.xlu0 %1491
        %v1493 = vrcp.pop %v1492
        %v1494 = vmul.f32 %v1489, %v1493
        %v1495 = vpack.c.bf16 %v1494, %v1494
        %1496 = vrot.lane.b32.xlu0 %v1311, 48
        %v1497 = vpop.permute.xlu0 %1496
        %v1499 = vsel %vm1370, %v1495, 0
        %v1502 = vsel %vm1388, %v1497, 0
        %1504 = vmatprep.subr.bf16.mxu0 0
        %1505 = vmatpush1.bf16.msra.mxu0 %v1502
        %1506 = vmatprep.subr.bf16.mxu0 0
        %1507 = vmatpush1.bf16.msra.mxu0 0
        %1508 = vmatprep.subr.bf16.mxu0 0
        %1509 = vmatpush1.bf16.msra.mxu0 0
        %1510 = vmatprep.subr.bf16.mxu0 0
        %1511 = vmatpush1.bf16.msra.mxu0 0
        %1512 = vmatprep.subr.bf16.mxu0 0
        %1513 = vmatpush1.bf16.msra.mxu0 0
        %1514 = vmatprep.subr.bf16.mxu0 0
        %1515 = vmatpush1.bf16.msra.mxu0 0
        %1516 = vmatprep.subr.bf16.mxu0 0
        %1517 = vmatpush1.bf16.msra.mxu0 0
        %1518 = vmatprep.subr.bf16.mxu0 0
        %1519 = vmatpush1.bf16.msra.mxu0 0
        %1520 = vmatprep.subr.bf16.mxu0 0
        %1521 = vmatpush1.bf16.msra.mxu0 0
        %1522 = vmatprep.subr.bf16.mxu0 0
        %1523 = vmatpush1.bf16.msra.mxu0 0
        %1524 = vmatprep.subr.bf16.mxu0 0
        %1525 = vmatpush1.bf16.msra.mxu0 0
        %1526 = vmatprep.subr.bf16.mxu0 0
        %1527 = vmatpush1.bf16.msra.mxu0 0
        %1528 = vmatprep.subr.bf16.mxu0 0
        %1529 = vmatpush1.bf16.msra.mxu0 0
        %1530 = vmatprep.subr.bf16.mxu0 0
        %1531 = vmatpush1.bf16.msra.mxu0 0
        %1532 = vmatprep.subr.bf16.mxu0 0
        %1533 = vmatpush1.bf16.msra.mxu0 0
        %1534 = vmatprep.subr.bf16.mxu0 0
        %1535 = vmatpush1.bf16.msra.mxu0 0
        %1536 = vmatprep.mubr.bf16.mxu0 0
        %1537 = vmatmul.mubr.bf16.gmra.mrb[0].mxu0 %v1499
        %v1538 = vpop.f32.mrb[0].mxu0
        %v1539 = vadd.f32 0.0, %v1538
        %v1540 = vpop.f32.mrb[0].mxu0
        %v1541 = vpop.f32.mrb[0].mxu0
        %v1542 = vpop.f32.mrb[0].mxu0
        %1543 = vdwg.mxu0
        %1545 = vrot.lane.b32.xlu0 %v1539, 16
        %v1546 = vpop.permute.xlu0 %1545
        %v1548 = vsel %vm1315, %v1427, %v1546
        %v1549 = vpack.c.bf16 %v1548, %v1548
        %v1550 = vld [vmem:[%s994] sm:$0xf]
        %v1551 = vld [vmem:[%s994 + $0x4] sm:$0xf]
        %v1552 = vld [vmem:[%s994 + $0x8] sm:$0xf]
        %v1553 = vld [vmem:[%s994 + $0xc] sm:$0xf]
        %v1554 = vld [vmem:[%s1002] sm:$0x1]
        %v1556 = vlaneseq
        %v1557 = vshrl.u32 %v1556, 7
        %v1558 = vsub.s32 0, %v1557
        %v1559 = vrot.slane %v1554, %v1558
        %v1565 = vunpack.c.l.b16 %v1550
        %v1566 = vunpack.c.l.b16 %v1551
        %v1567 = vunpack.c.l.b16 %v1552
        %v1568 = vunpack.c.l.b16 %v1553
        %v1569 = vpack.c.b16 %v1566, %v1565
        %v1570 = vpack.c.b16 %v1568, %v1567
        %v1574 = vsel %vm1267, %v1549, 0
        %1576 = vmatprep.subr.bf16.mxu0 0
        %1577 = vmatpush1.bf16.msra.mxu0 %v1569
        %1578 = vmatprep.subr.bf16.mxu0 0
        %1579 = vmatpush1.bf16.msra.mxu0 %v1570
        %1580 = vmatprep.subr.bf16.mxu0 0
        %1581 = vmatpush1.bf16.msra.mxu0 0
        %1582 = vmatprep.subr.bf16.mxu0 0
        %1583 = vmatpush1.bf16.msra.mxu0 0
        %1584 = vmatprep.subr.bf16.mxu0 0
        %1585 = vmatpush1.bf16.msra.mxu0 0
        %1586 = vmatprep.subr.bf16.mxu0 0
        %1587 = vmatpush1.bf16.msra.mxu0 0
        %1588 = vmatprep.subr.bf16.mxu0 0
        %1589 = vmatpush1.bf16.msra.mxu0 0
        %1590 = vmatprep.subr.bf16.mxu0 0
        %1591 = vmatpush1.bf16.msra.mxu0 0
        %1592 = vmatprep.subr.bf16.mxu0 0
        %1593 = vmatpush1.bf16.msra.mxu0 0
        %1594 = vmatprep.subr.bf16.mxu0 0
        %1595 = vmatpush1.bf16.msra.mxu0 0
        %1596 = vmatprep.subr.bf16.mxu0 0
        %1597 = vmatpush1.bf16.msra.mxu0 0
        %1598 = vmatprep.subr.bf16.mxu0 0
        %1599 = vmatpush1.bf16.msra.mxu0 0
        %1600 = vmatprep.subr.bf16.mxu0 0
        %1601 = vmatpush1.bf16.msra.mxu0 0
        %1602 = vmatprep.subr.bf16.mxu0 0
        %1603 = vmatpush1.bf16.msra.mxu0 0
        %1604 = vmatprep.subr.bf16.mxu0 0
        %1605 = vmatpush1.bf16.msra.mxu0 0
        %1606 = vmatprep.subr.bf16.mxu0 0
        %1607 = vmatpush1.bf16.msra.mxu0 0
        %1608 = vmatprep.mubr.bf16.mxu0 0
        %1609 = vmatmul.mubr.bf16.gmra.mrb[0].mxu0 %v1574
        %v1610 = vpop.f32.mrb[0].mxu0
        %v1611 = vadd.f32 %v1559, %v1610
        %v1612 = vpop.f32.mrb[0].mxu0
        %v1613 = vpop.f32.mrb[0].mxu0
        %v1614 = vpop.f32.mrb[0].mxu0
        %1615 = vdwg.mxu0
        %v1616 = vadd.f32 %v1611, %v1241
        %v1617 = vld [vmem:[%s1010] sm:$0x1]
        %v1618 = vld [vmem:[%s1018] sm:$0x1]
        %v1619 = vsel %vm1267, %v1616, 0.0
        %1620 = vadd.xlane.f32.xlu0 %v1619
        %v1621 = vpop.xlane.xlu0 %1620
        %v1622 = vrcp.pop 32.0
        %v1623 = vmul.f32 %v1621, %v1622
        %v1624 = vsub.f32 %v1616, %v1623
        %v1625 = vmul.f32 %v1624, %v1624
        %v1626 = vsel %vm1267, %v1625, 0.0
        %1627 = vadd.xlane.f32.xlu0 %v1626
        %v1628 = vpop.xlane.xlu0 %1627
        %v1629 = vmul.f32 %v1628, %v1622
        %v1630 = vadd.f32 %v1629, 1e-12
        %v1631 = vrsqrt.pop %v1630
        %v1632 = vmul.f32 %v1624, %v1631
        %v1634 = vlaneseq
        %v1635 = vshrl.u32 %v1634, 7
        %v1636 = vsub.s32 0, %v1635
        %v1637 = vrot.slane %v1617, %v1636
        %v1639 = vmul.f32 %v1632, %v1637
        %v1641 = vlaneseq
        %v1642 = vshrl.u32 %v1641, 7
        %v1643 = vsub.s32 0, %v1642
        %v1644 = vrot.slane %v1618, %v1643
        %v1646 = vadd.f32 %v1639, %v1644
        %v1647 = vpack.c.bf16 %v1646, %v1646
        %v1648 = vld [vmem:[%s1027] sm:$0xf]
        %v1649 = vld [vmem:[%s1027 + $0x4] sm:$0xf]
        %v1650 = vld [vmem:[%s1027 + $0x8] sm:$0xf]
        %v1651 = vld [vmem:[%s1027 + $0xc] sm:$0xf]
        %v1652 = vld [vmem:[%s1035] sm:$0x1]
        %v1654 = vlaneseq
        %v1655 = vshrl.u32 %v1654, 7
        %v1656 = vsub.s32 0, %v1655
        %v1657 = vrot.slane %v1652, %v1656
        %v1663 = vunpack.c.l.b16 %v1648
        %v1664 = vunpack.c.l.b16 %v1649
        %v1665 = vunpack.c.l.b16 %v1650
        %v1666 = vunpack.c.l.b16 %v1651
        %v1667 = vpack.c.b16 %v1664, %v1663
        %v1668 = vpack.c.b16 %v1666, %v1665
        %v1672 = vsel %vm1267, %v1647, 0
        %1674 = vmatprep.subr.bf16.mxu0 0
        %1675 = vmatpush1.bf16.msra.mxu0 %v1667
        %1676 = vmatprep.subr.bf16.mxu0 0
        %1677 = vmatpush1.bf16.msra.mxu0 %v1668
        %1678 = vmatprep.subr.bf16.mxu0 0
        %1679 = vmatpush1.bf16.msra.mxu0 0
        %1680 = vmatprep.subr.bf16.mxu0 0
        %1681 = vmatpush1.bf16.msra.mxu0 0
        %1682 = vmatprep.subr.bf16.mxu0 0
        %1683 = vmatpush1.bf16.msra.mxu0 0
        %1684 = vmatprep.subr.bf16.mxu0 0
        %1685 = vmatpush1.bf16.msra.mxu0 0
        %1686 = vmatprep.subr.bf16.mxu0 0
        %1687 = vmatpush1.bf16.msra.mxu0 0
        %1688 = vmatprep.subr.bf16.mxu0 0
        %1689 = vmatpush1.bf16.msra.mxu0 0
        %1690 = vmatprep.subr.bf16.mxu0 0
        %1691 = vmatpush1.bf16.msra.mxu0 0
        %1692 = vmatprep.subr.bf16.mxu0 0
        %1693 = vmatpush1.bf16.msra.mxu0 0
        %1694 = vmatprep.subr.bf16.mxu0 0
        %1695 = vmatpush1.bf16.msra.mxu0 0
        %1696 = vmatprep.subr.bf16.mxu0 0
        %1697 = vmatpush1.bf16.msra.mxu0 0
        %1698 = vmatprep.subr.bf16.mxu0 0
        %1699 = vmatpush1.bf16.msra.mxu0 0
        %1700 = vmatprep.subr.bf16.mxu0 0
        %1701 = vmatpush1.bf16.msra.mxu0 0
        %1702 = vmatprep.subr.bf16.mxu0 0
        %1703 = vmatpush1.bf16.msra.mxu0 0
        %1704 = vmatprep.subr.bf16.mxu0 0
        %1705 = vmatpush1.bf16.msra.mxu0 0
        %1706 = vmatprep.mubr.bf16.mxu0 0
        %1707 = vmatmul.mubr.bf16.gmra.mrb[0].mxu0 %v1672
        %v1708 = vpop.f32.mrb[0].mxu0
        %v1709 = vadd.f32 %v1657, %v1708
        %v1710 = vpop.f32.mrb[0].mxu0
        %v1711 = vpop.f32.mrb[0].mxu0
        %v1712 = vpop.f32.mrb[0].mxu0
        %1713 = vdwg.mxu0
        %v1714 = vmul.f32 %v1709, %v1709
        %v1715 = vmul.f32 %v1709, %v1714
        %v1716 = vmul.f32 %v1715, 0.044715
        %v1717 = vadd.f32 %v1709, %v1716
        %v1718 = vmul.f32 %v1717, 0.7978846
        %v1719 = vtanh.pop %v1718
        %v1720 = vadd.f32 %v1719, 1.0
        %v1721 = vmul.f32 %v1720, 0.5
        %v1722 = vmul.f32 %v1709, %v1721
        %v1723 = vpack.c.bf16 %v1722, %v1722
        %v1724 = vld [vmem:[%s1044] sm:$0xf]
        %v1725 = vld [vmem:[%s1044 + $0x4] sm:$0xf]
        %v1726 = vld [vmem:[%s1044 + $0x8] sm:$0xf]
        %v1727 = vld [vmem:[%s1044 + $0xc] sm:$0xf]
        %v1728 = vld [vmem:[%s1044 + $0x10] sm:$0xf]
        %v1729 = vld [vmem:[%s1044 + $0x14] sm:$0xf]
        %v1730 = vld [vmem:[%s1044 + $0x18] sm:$0xf]
        %v1731 = vld [vmem:[%s1044 + $0x1c] sm:$0xf]
        %v1732 = vld [vmem:[%s1052] sm:$0x1]
        %v1734 = vlaneseq
        %v1735 = vshrl.u32 %v1734, 7
        %v1736 = vsub.s32 0, %v1735
        %v1737 = vrot.slane %v1732, %v1736
        %v1747 = vunpack.c.l.b16 %v1724
        %v1748 = vunpack.c.l.b16 %v1725
        %v1749 = vunpack.c.l.b16 %v1726
        %v1750 = vunpack.c.l.b16 %v1727
        %v1751 = vunpack.c.l.b16 %v1728
        %v1752 = vunpack.c.l.b16 %v1729
        %v1753 = vunpack.c.l.b16 %v1730
        %v1754 = vunpack.c.l.b16 %v1731
        %v1755 = vpack.c.b16 %v1748, %v1747
        %v1756 = vpack.c.b16 %v1750, %v1749
        %v1757 = vpack.c.b16 %v1752, %v1751
        %v1758 = vpack.c.b16 %v1754, %v1753
        %vm1763 = vcmask 523264
        %v1765 = vsel %vm1763, %v1723, 0
        %1767 = vmatprep.subr.bf16.mxu0 0
        %1768 = vmatpush1.bf16.msra.mxu0 %v1755
        %1769 = vmatprep.subr.bf16.mxu0 0
        %1770 = vmatpush1.bf16.msra.mxu0 %v1756
        %1771 = vmatprep.subr.bf16.mxu0 0
        %1772 = vmatpush1.bf16.msra.mxu0 %v1757
        %1773 = vmatprep.subr.bf16.mxu0 0
        %1774 = vmatpush1.bf16.msra.mxu0 %v1758
        %1775 = vmatprep.subr.bf16.mxu0 0
        %1776 = vmatpush1.bf16.msra.mxu0 0
        %1777 = vmatprep.subr.bf16.mxu0 0
        %1778 = vmatpush1.bf16.msra.mxu0 0
        %1779 = vmatprep.subr.bf16.mxu0 0
        %1780 = vmatpush1.bf16.msra.mxu0 0
        %1781 = vmatprep.subr.bf16.mxu0 0
        %1782 = vmatpush1.bf16.msra.mxu0 0
        %1783 = vmatprep.subr.bf16.mxu0 0
        %1784 = vmatpush1.bf16.msra.mxu0 0
        %1785 = vmatprep.subr.bf16.mxu0 0
        %1786 = vmatpush1.bf16.msra.mxu0 0
        %1787 = vmatprep.subr.bf16.mxu0 0
        %1788 = vmatpush1.bf16.msra.mxu0 0
        %1789 = vmatprep.subr.bf16.mxu0 0
        %1790 = vmatpush1.bf16.msra.mxu0 0
        %1791 = vmatprep.subr.bf16.mxu0 0
        %1792 = vmatpush1.bf16.msra.mxu0 0
        %1793 = vmatprep.subr.bf16.mxu0 0
        %1794 = vmatpush1.bf16.msra.mxu0 0
        %1795 = vmatprep.subr.bf16.mxu0 0
        %1796 = vmatpush1.bf16.msra.mxu0 0
        %1797 = vmatprep.subr.bf16.mxu0 0
        %1798 = vmatpush1.bf16.msra.mxu0 0
        %1799 = vmatprep.mubr.bf16.mxu0 0
        %1800 = vmatmul.mubr.bf16.gmra.mrb[0].mxu0 %v1765
        %v1801 = vpop.f32.mrb[0].mxu0
        %v1802 = vadd.f32 %v1737, %v1801
        %v1803 = vpop.f32.mrb[0].mxu0
        %v1804 = vpop.f32.mrb[0].mxu0
        %v1805 = vpop.f32.mrb[0].mxu0
        %1806 = vdwg.mxu0
        %v1807 = vadd.f32 %v1802, %v1646
        %v1808 = vld [vmem:[%s1060] sm:$0x1]
        %v1809 = vld [vmem:[%s1068] sm:$0x1]
        %v1810 = vsel %vm1267, %v1807, 0.0
        %1811 = vadd.xlane.f32.xlu0 %v1810
        %v1812 = vpop.xlane.xlu0 %1811
        %v1813 = vmul.f32 %v1812, %v1622
        %v1814 = vsub.f32 %v1807, %v1813
        %v1815 = vmul.f32 %v1814, %v1814
        %v1816 = vsel %vm1267, %v1815, 0.0
        %1817 = vadd.xlane.f32.xlu0 %v1816
        %v1818 = vpop.xlane.xlu0 %1817
        %v1819 = vmul.f32 %v1818, %v1622
        %v1820 = vadd.f32 %v1819, 1e-12
        %v1821 = vrsqrt.pop %v1820
        %v1822 = vmul.f32 %v1814, %v1821
        %v1824 = vlaneseq
        %v1825 = vshrl.u32 %v1824, 7
        %v1826 = vsub.s32 0, %v1825
        %v1827 = vrot.slane %v1808, %v1826
        %v1829 = vmul.f32 %v1822, %v1827
        %v1831 = vlaneseq
        %v1832 = vshrl.u32 %v1831, 7
        %v1833 = vsub.s32 0, %v1832
        %v1834 = vrot.slane %v1809, %v1833
        %v1836 = vadd.f32 %v1829, %v1834
        %1837 = vst.msk [vmem:[#allocation2] sm:$0xff] %vm1267, %v1836
        %p1838 = scmp.eq.s32.totalorder %s53, 1
        // Predicated region
        $region185: #{tpu_custom_call.1} parent=99 // pred_check
          %p1839 = pneg %p1838
        $region186: #{tpu_custom_call.1} parent=99 // pred_check_branch
          %1841 = sbr.rel (%p1839) target = $region188
        $region187: #{tpu_custom_call.1} parent=99 // pred_region
          %v1842 = vpack.c.bf16 %v1836, %v1836
          %v1843 = vld [vmem:[#allocation26] sm:$0xf]
          %v1844 = vld [vmem:[#allocation26 + $0x4] sm:$0xf]
          %v1845 = vld [vmem:[#allocation26 + $0x8] sm:$0xf]
          %v1846 = vld [vmem:[#allocation26 + $0xc] sm:$0xf]
          %v1847 = vld [vmem:[#allocation27] sm:$0x1]
          %v1849 = vlaneseq
          %v1850 = vshrl.u32 %v1849, 7
          %v1851 = vsub.s32 0, %v1850
          %v1852 = vrot.slane %v1847, %v1851
          %v1858 = vunpack.c.l.b16 %v1843
          %v1859 = vunpack.c.l.b16 %v1844
          %v1860 = vunpack.c.l.b16 %v1845
          %v1861 = vunpack.c.l.b16 %v1846
          %v1862 = vpack.c.b16 %v1859, %v1858
          %v1863 = vpack.c.b16 %v1861, %v1860
          %v1867 = vsel %vm1267, %v1842, 0
          %1869 = vmatprep.subr.bf16.mxu0 0
          %1870 = vmatpush1.bf16.msra.mxu0 %v1862
          %1871 = vmatprep.subr.bf16.mxu0 0
          %1872 = vmatpush1.bf16.msra.mxu0 %v1863
          %1873 = vmatprep.subr.bf16.mxu0 0
          %1874 = vmatpush1.bf16.msra.mxu0 0
          %1875 = vmatprep.subr.bf16.mxu0 0
          %1876 = vmatpush1.bf16.msra.mxu0 0
          %1877 = vmatprep.subr.bf16.mxu0 0
          %1878 = vmatpush1.bf16.msra.mxu0 0
          %1879 = vmatprep.subr.bf16.mxu0 0
          %1880 = vmatpush1.bf16.msra.mxu0 0
          %1881 = vmatprep.subr.bf16.mxu0 0
          %1882 = vmatpush1.bf16.msra.mxu0 0
          %1883 = vmatprep.subr.bf16.mxu0 0
          %1884 = vmatpush1.bf16.msra.mxu0 0
          %1885 = vmatprep.subr.bf16.mxu0 0
          %1886 = vmatpush1.bf16.msra.mxu0 0
          %1887 = vmatprep.subr.bf16.mxu0 0
          %1888 = vmatpush1.bf16.msra.mxu0 0
          %1889 = vmatprep.subr.bf16.mxu0 0
          %1890 = vmatpush1.bf16.msra.mxu0 0
          %1891 = vmatprep.subr.bf16.mxu0 0
          %1892 = vmatpush1.bf16.msra.mxu0 0
          %1893 = vmatprep.subr.bf16.mxu0 0
          %1894 = vmatpush1.bf16.msra.mxu0 0
          %1895 = vmatprep.subr.bf16.mxu0 0
          %1896 = vmatpush1.bf16.msra.mxu0 0
          %1897 = vmatprep.subr.bf16.mxu0 0
          %1898 = vmatpush1.bf16.msra.mxu0 0
          %1899 = vmatprep.subr.bf16.mxu0 0
          %1900 = vmatpush1.bf16.msra.mxu0 0
          %1901 = vmatprep.mubr.bf16.mxu0 0
          %1902 = vmatmul.mubr.bf16.gmra.mrb[0].mxu0 %v1867
          %v1903 = vpop.f32.mrb[0].mxu0
          %v1904 = vadd.f32 %v1852, %v1903
          %v1905 = vpop.f32.mrb[0].mxu0
          %v1906 = vpop.f32.mrb[0].mxu0
          %v1907 = vpop.f32.mrb[0].mxu0
          %1908 = vdwg.mxu0
          %v1909 = vmax.f32 %v1904, 0.0
          %1910 = vst [vmem:[%s1196] sm:$0xff] %v1909
          %v1911 = vld [vmem:[#allocation23] sm:$0xf]
          %v1912 = vld [vmem:[#allocation23 + $0x4] sm:$0xf]
          %v1913 = vld [vmem:[#allocation23 + $0x8] sm:$0xf]
          %v1914 = vld [vmem:[#allocation23 + $0xc] sm:$0xf]
          %v1915 = vld [vmem:[#allocation24] sm:$0x1]
          %v1920 = vunpack.c.l.b16 %v1911
          %v1921 = vunpack.c.l.b16 %v1912
          %v1922 = vunpack.c.l.b16 %v1913
          %v1923 = vunpack.c.l.b16 %v1914
          %v1924 = vpack.c.b16 %v1921, %v1920
          %v1925 = vpack.c.b16 %v1923, %v1922
          %1928 = vmatprep.subr.bf16.mxu0 0
          %1929 = vmatpush1.bf16.msra.mxu0 %v1924
          %1930 = vmatprep.subr.bf16.mxu0 0
          %1931 = vmatpush1.bf16.msra.mxu0 %v1925
          %1932 = vmatprep.subr.bf16.mxu0 0
          %1933 = vmatpush1.bf16.msra.mxu0 0
          %1934 = vmatprep.subr.bf16.mxu0 0
          %1935 = vmatpush1.bf16.msra.mxu0 0
          %1936 = vmatprep.subr.bf16.mxu0 0
          %1937 = vmatpush1.bf16.msra.mxu0 0
          %1938 = vmatprep.subr.bf16.mxu0 0
          %1939 = vmatpush1.bf16.msra.mxu0 0
          %1940 = vmatprep.subr.bf16.mxu0 0
          %1941 = vmatpush1.bf16.msra.mxu0 0
          %1942 = vmatprep.subr.bf16.mxu0 0
          %1943 = vmatpush1.bf16.msra.mxu0 0
          %1944 = vmatprep.subr.bf16.mxu0 0
          %1945 = vmatpush1.bf16.msra.mxu0 0
          %1946 = vmatprep.subr.bf16.mxu0 0
          %1947 = vmatpush1.bf16.msra.mxu0 0
          %1948 = vmatprep.subr.bf16.mxu0 0
          %1949 = vmatpush1.bf16.msra.mxu0 0
          %1950 = vmatprep.subr.bf16.mxu0 0
          %1951 = vmatpush1.bf16.msra.mxu0 0
          %1952 = vmatprep.subr.bf16.mxu0 0
          %1953 = vmatpush1.bf16.msra.mxu0 0
          %1954 = vmatprep.subr.bf16.mxu0 0
          %1955 = vmatpush1.bf16.msra.mxu0 0
          %1956 = vmatprep.subr.bf16.mxu0 0
          %1957 = vmatpush1.bf16.msra.mxu0 0
          %1958 = vmatprep.subr.bf16.mxu0 0
          %1959 = vmatpush1.bf16.msra.mxu0 0
          %1960 = vmatprep.mubr.bf16.mxu0 0
          %1961 = vmatmul.mubr.bf16.gmra.mrb[0].mxu0 %v1867
          %v1962 = vpop.f32.mrb[0].mxu0
          %v1963 = vadd.f32 %v1915, %v1962
          %v1964 = vpop.f32.mrb[0].mxu0
          %v1965 = vpop.f32.mrb[0].mxu0
          %v1966 = vpop.f32.mrb[0].mxu0
          %1967 = vdwg.mxu0
          %v1968 = vtanh.pop %v1963
          %v1969 = vpack.c.bf16 %v1968, %v1968
          %v1970 = vld [vmem:[#allocation26] sm:$0xf]
          %v1971 = vld [vmem:[#allocation26 + $0x4] sm:$0xf]
          %v1972 = vld [vmem:[#allocation26 + $0x8] sm:$0xf]
          %v1973 = vld [vmem:[#allocation26 + $0xc] sm:$0xf]
          %v1974 = vld [vmem:[#allocation27] sm:$0x1]
          %v1979 = vunpack.c.l.b16 %v1970
          %v1980 = vunpack.c.l.b16 %v1971
          %v1981 = vunpack.c.l.b16 %v1972
          %v1982 = vunpack.c.l.b16 %v1973
          %v1983 = vpack.c.b16 %v1980, %v1979
          %v1984 = vpack.c.b16 %v1982, %v1981
          %v1988 = vsel %vm1267, %v1969, 0
          %1990 = vmatprep.subr.bf16.mxu0 0
          %1991 = vmatpush1.bf16.msra.mxu0 %v1983
          %1992 = vmatprep.subr.bf16.mxu0 0
          %1993 = vmatpush1.bf16.msra.mxu0 %v1984
          %1994 = vmatprep.subr.bf16.mxu0 0
          %1995 = vmatpush1.bf16.msra.mxu0 0
          %1996 = vmatprep.subr.bf16.mxu0 0
          %1997 = vmatpush1.bf16.msra.mxu0 0
          %1998 = vmatprep.subr.bf16.mxu0 0
          %1999 = vmatpush1.bf16.msra.mxu0 0
          %2000 = vmatprep.subr.bf16.mxu0 0
          %2001 = vmatpush1.bf16.msra.mxu0 0
          %2002 = vmatprep.subr.bf16.mxu0 0
          %2003 = vmatpush1.bf16.msra.mxu0 0
          %2004 = vmatprep.subr.bf16.mxu0 0
          %2005 = vmatpush1.bf16.msra.mxu0 0
          %2006 = vmatprep.subr.bf16.mxu0 0
          %2007 = vmatpush1.bf16.msra.mxu0 0
          %2008 = vmatprep.subr.bf16.mxu0 0
          %2009 = vmatpush1.bf16.msra.mxu0 0
          %2010 = vmatprep.subr.bf16.mxu0 0
          %2011 = vmatpush1.bf16.msra.mxu0 0
          %2012 = vmatprep.subr.bf16.mxu0 0
          %2013 = vmatpush1.bf16.msra.mxu0 0
          %2014 = vmatprep.subr.bf16.mxu0 0
          %2015 = vmatpush1.bf16.msra.mxu0 0
          %2016 = vmatprep.subr.bf16.mxu0 0
          %2017 = vmatpush1.bf16.msra.mxu0 0
          %2018 = vmatprep.subr.bf16.mxu0 0
          %2019 = vmatpush1.bf16.msra.mxu0 0
          %2020 = vmatprep.subr.bf16.mxu0 0
          %2021 = vmatpush1.bf16.msra.mxu0 0
          %2022 = vmatprep.mubr.bf16.mxu0 0
          %2023 = vmatmul.mubr.bf16.gmra.mrb[0].mxu0 %v1988
          %v2024 = vpop.f32.mrb[0].mxu0
          %v2025 = vadd.f32 %v1974, %v2024
          %v2026 = vpop.f32.mrb[0].mxu0
          %v2027 = vpop.f32.mrb[0].mxu0
          %v2028 = vpop.f32.mrb[0].mxu0
          %2029 = vdwg.mxu0
          %v2030 = vmax.f32 %v2025, 0.0
          %2031 = vst [vmem:[%s1202] sm:$0x1] %v2030
        $region188: #{tpu_custom_call.1} parent=99 // pred_fallthru
          _
        %s2032 = sand.u32 %s558, 1
        %s2033 = scalar_lea.sflag [#allocation5], %s2032
        %s2034 = sand.u32 %s558, 1
        %s2035 = smul.addr %s2034, 8
        %s2036 = scalar_lea.vmem [#allocation29], %s2035
        %s2037 = sand.u32 %s584, 1
        %s2038 = scalar_lea.sflag [#allocation31], %s2037
        %s2039 = sand.u32 %s584, 1
        %s2040 = scalar_lea.vmem [#allocation30], %s2039
        // Predicated region
        $region189: #{tpu_custom_call.1} parent=99 // pred_check
          %p2041 = pneg %p568
        $region190: #{tpu_custom_call.1} parent=99 // pred_check_branch
          %2043 = sbr.rel (%p2041) target = $region192
        $region191: #{tpu_custom_call.1} parent=99 // pred_region
          %s2045 = ssub.s32 128, 128
          %2046 = vsyncadd %s2033, %s2045
          %s2047 = smul.addr %s52, 128
          %s2048 = scalar_lea.hbm %s20, %s2047
          %s2050 = sshll.u32 %s2036, 4
          %s2051 = int_to_ptr.vmem [resolvable:$true] %s2050
          %2053 = dma.vmem_to_hbm [thread:$0]  %s2051, 128, %s2048, %s2033
        $region192: #{tpu_custom_call.1} parent=99 // pred_fallthru
          _
        // Predicated region
        $region193: #{tpu_custom_call.1} parent=99 // pred_check
          %p2054 = pneg %p594
        $region194: #{tpu_custom_call.1} parent=99 // pred_check_branch
          %2056 = sbr.rel (%p2054) target = $region196
        $region195: #{tpu_custom_call.1} parent=99 // pred_region
          %s2058 = ssub.s32 16, 16
          %2059 = vsyncadd %s2038, %s2058
          %s2060 = smul.addr %s52, 16
          %s2061 = scalar_lea.hbm %s21, %s2060
          %s2063 = sshll.u32 %s2040, 4
          %s2064 = int_to_ptr.vmem [resolvable:$true] %s2063
          %2066 = dma.vmem_to_hbm [thread:$0]  %s2064, 16, %s2061, %s2038
        $region196: #{tpu_custom_call.1} parent=99 // pred_fallthru
          _
      $region100: #{tpu_custom_call.1} parent=5 // pred_fallthru
        _
      %p2067 = scmp.le.s32.totalorder 2, %s43
      // Predicated region
      $region197: #{tpu_custom_call.1} parent=5 // pred_check
        %p2068 = pneg %p2067
      $region198: #{tpu_custom_call.1} parent=5 // pred_check_branch
        %2070 = sbr.rel (%p2068) target = $region200
      $region199: #{tpu_custom_call.1} parent=5 // pred_region
        %s2071 = ssub.s32 %s43, 2
        // Predicated region
        $region201: #{tpu_custom_call.1} parent=199 // pred_check
          %p2072 = pneg %p574
        $region202: #{tpu_custom_call.1} parent=199 // pred_check_branch
          %2074 = sbr.rel (%p2072) target = $region204
        $region203: #{tpu_custom_call.1} parent=199 // pred_region
          %s2075 = sand.u32 %s559, 1
          %s2076 = scalar_lea.sflag [#allocation5], %s2075
          %s2077 = sand.u32 %s559, 1
          %s2078 = smul.addr %s2077, 8
          %s2079 = scalar_lea.vmem [#allocation29], %s2078
          %2080 = dma.done %s2076, 128
        $region204: #{tpu_custom_call.1} parent=199 // pred_fallthru
          _
        // Predicated region
        $region205: #{tpu_custom_call.1} parent=199 // pred_check
          %p2081 = pneg %p600
        $region206: #{tpu_custom_call.1} parent=199 // pred_check_branch
          %2083 = sbr.rel (%p2081) target = $region208
        $region207: #{tpu_custom_call.1} parent=199 // pred_region
          %s2084 = sand.u32 %s585, 1
          %s2085 = scalar_lea.sflag [#allocation31], %s2084
          %s2086 = sand.u32 %s585, 1
          %s2087 = scalar_lea.vmem [#allocation30], %s2086
          %2088 = dma.done %s2085, 16
        $region208: #{tpu_custom_call.1} parent=199 // pred_fallthru
          _
      $region200: #{tpu_custom_call.1} parent=5 // pred_fallthru
        _
    $region6: #{tpu_custom_call.1} parent=1 // loop_footer
      %s47 = sadd.s32 1, %s43
    $region7: #{tpu_custom_call.1} parent=1 // loop_footer_branch
      %42 = sbr.rel target = $region3
    $region8: #{tpu_custom_call.1} parent=1 // loop_exit
      _
    %2089 = vsyncpa [#allocation4], 1
    %s2090 = scalar_lea.sflag [#allocation4], 1
    %2091 = vsyncpa %s2090, 1
    %2092 = vsyncpa [#allocation7], 1
    %s2093 = scalar_lea.sflag [#allocation7], 1
    %2094 = vsyncpa %s2093, 1
    %2095 = vsyncpa [#allocation10], 1
    %2096 = vsyncpa [#allocation25], 1
    %2097 = vsyncpa [#allocation28], 1
    %2098 = vsyncpa [#allocation5], 1
    %s2099 = scalar_lea.sflag [#allocation5], 1
    %2100 = vsyncpa %s2099, 1
    %2101 = vsyncpa [#allocation31], 1
    %s2102 = scalar_lea.sflag [#allocation31], 1
    %2103 = vsyncpa %s2102, 1

</llo_original>
